<compile_context>
chip_gen: v5e
topology: v5e:2x2
jax: 0.10.0
libtpu: 0.0.40
codegen_flags: <defaults>
</compile_context>

<pallas_src>
import functools

import jax
import jax.numpy as jnp
from jax.experimental import pallas as pl
from jax.experimental.pallas import tpu as pltpu


def _round_up(x, m):
    return (x + m - 1) // m * m


def _attention_fusion_kernel(ppt_ref, aabt_ref, w2_ref, b2_ref, out_ref, *,
                             tb, ch, n_chunks):
    """Computes one (tb, tv) tile of attention logits.

    ppt_ref  : (H, tb)  patient projection tile, transposed (B on lanes)
    aabt_ref : (H, tv)  molecule projection tile, transposed, b1 folded in
    w2_ref   : (1, H)   second Linear weight (row vector), constant block
    b2_ref   : (1, 1)   second Linear bias, SMEM scalar
    out_ref  : (tb, tv) logits tile (V-tile on lanes -> lane-dense stores)
    """
    ppt = ppt_ref[...]            # (H, tb)  tiny, a few vregs
    w2_row = w2_ref[...]          # (1, H)
    b2 = b2_ref[0, 0]

    for c in range(n_chunks):     # static; bounds the live slab to (H, ch)
        off = c * ch
        chunk = aabt_ref[:, off:off + ch]                 # (H, ch), V on lanes
        for b in range(tb):                               # static
            # Lane-dense tanh on the EUP (the binding unit).
            hid = jnp.tanh(ppt[:, b:b + 1] + chunk)       # (H, ch)
            # Linear(H -> 1) as an MXU matvec, stored immediately (no concat).
            row = jnp.dot(w2_row, hid,
                          precision=jax.lax.Precision.HIGHEST,
                          preferred_element_type=jnp.float32)   # (1, ch)
            out_ref[b:b + 1, off:off + ch] = (row + b2).astype(out_ref.dtype)


def attention_fusion(patient_emb, atc4_emb, w1, b1, w2, b2, *, tv_max=2048):
    """patient_emb: (B, Pd), atc4_emb: (V, Md), w1: (Pd+Md, H), b1: (H,),
    w2: (H,), b2: scalar  ->  logits (B, V), matching the PyTorch module."""
    f32 = jnp.float32
    hp = jax.lax.Precision.HIGHEST

    patient_emb = patient_emb.astype(f32)
    atc4_emb = atc4_emb.astype(f32)
    w1 = w1.astype(f32)
    b1 = b1.astype(f32)

    B, pd = patient_emb.shape
    V, _ = atc4_emb.shape
    H = w1.shape[1]

    # Hoisted projections, produced directly in (H, .) layout (exact
    # decomposition of the concat; no transpose / pad HBM passes).
    pp_t = jax.lax.dot_general(w1[:pd], patient_emb,
                               (((0,), (1,)), ((), ())), precision=hp)      # (H, B)
    aab_t = jax.lax.dot_general(w1[pd:], atc4_emb,
                                (((0,), (1,)), ((), ())), precision=hp)
    aab_t = aab_t + b1[:, None]                                             # (H, V)

    # Tile sizes: lane-dense V tile (multiple of 128, up to tv_max); the B tile
    # covers the whole batch when it fits on lanes (<=128), else 128-wide tiles.
    tv = min(tv_max, _round_up(V, 128))
    tb = B if B <= 128 else 128
    # Lane-chunk so the live (H, ch) f32 slab stays around <=16 vregs.
    ch = max(128, min(tv, (65536 // max(H * 4, 1)) // 128 * 128))
    while tv % ch != 0:
        ch -= 128
    n_chunks = tv // ch
    # Keep the static unroll bounded (compile time); correctness unaffected.
    max_bodies = 256
    if tb * n_chunks > max_bodies:
        n_chunks = max(1, max_bodies // tb)
        tv = ch * n_chunks

    nv = pl.cdiv(V, tv)
    nb = pl.cdiv(B, tb)

    w2_row = w2.astype(f32).reshape(1, H)
    b2_2d = jnp.asarray(b2, f32).reshape(1, 1)

    kernel = functools.partial(_attention_fusion_kernel,
                               tb=tb, ch=ch, n_chunks=n_chunks)

    cost = pl.CostEstimate(flops=int(2 * B * V * H),
                           transcendentals=int(B * V * H),
                           bytes_accessed=int(4 * (B * H + V * H + B * V)))

    out = pl.pallas_call(
        kernel,
        out_shape=jax.ShapeDtypeStruct((B, V), f32),
        grid_spec=pltpu.PrefetchScalarGridSpec(
            num_scalar_prefetch=0,
            # V outer, B inner (fastest-varying): the molecule block index is
            # constant across consecutive steps, so Pallas skips its re-fetch.
            grid=(nv, nb),
            in_specs=[
                pl.BlockSpec((H, tb), lambda vi, bi: (0, bi)),   # patient (H, B)
                pl.BlockSpec((H, tv), lambda vi, bi: (0, vi)),   # molecule (H, V)
                pl.BlockSpec((1, H), lambda vi, bi: (0, 0)),     # w2 (constant)
                pl.BlockSpec((1, 1), lambda vi, bi: (0, 0),      # b2 scalar
                             memory_space=pltpu.MemorySpace.SMEM),
            ],
            out_specs=pl.BlockSpec((tb, tv), lambda vi, bi: (bi, vi)),
        ),
        compiler_params=pltpu.CompilerParams(
            dimension_semantics=("parallel", "arbitrary")),
        cost_estimate=cost,
    )(pp_t, aab_t, w2_row, b2_2d)

    return out


def attention_fusion_ref(patient_emb, atc4_emb, w1, b1, w2, b2):
    """Pure-JAX reference matching the PyTorch forward exactly."""
    hp = jax.lax.Precision.HIGHEST
    B = patient_emb.shape[0]
    V = atc4_emb.shape[0]
    p_exp = jnp.broadcast_to(patient_emb[:, None, :], (B, V, patient_emb.shape[1]))
    a_exp = jnp.broadcast_to(atc4_emb[None, :, :], (B, V, atc4_emb.shape[1]))
    combined = jnp.concatenate([p_exp, a_exp], axis=-1)
    h = jnp.tanh(jnp.matmul(combined, w1, precision=hp) + b1)
    return jnp.matmul(h, w2, precision=hp) + b2


if __name__ == "__main__":
    # Small, module-consistent shapes (V intentionally not a lane multiple to
    # exercise the ragged-tile path; no explicit padding is done anywhere).
    B, V = 4, 300
    patient_dim, mol_dim, hidden_dim = 16, 16, 32

    key = jax.random.PRNGKey(0)
    k_p, k_a, k_w1, k_b1, k_w2, k_b2 = jax.random.split(key, 6)

    patient_emb = jax.random.normal(k_p, (B, patient_dim), jnp.float32)
    atc4_emb = jax.random.normal(k_a, (V, mol_dim), jnp.float32)

    # Deterministic parameter init (uniform, PyTorch-Linear-like scale).
    in_dim = patient_dim + mol_dim
    s1 = 1.0 / jnp.sqrt(in_dim)
    s2 = 1.0 / jnp.sqrt(hidden_dim)
    w1 = jax.random.uniform(k_w1, (in_dim, hidden_dim), jnp.float32, -s1, s1)
    b1 = jax.random.uniform(k_b1, (hidden_dim,), jnp.float32, -s1, s1)
    w2 = jax.random.uniform(k_w2, (hidden_dim,), jnp.float32, -s2, s2)
    b2 = jax.random.uniform(k_b2, (), jnp.float32, -s2, s2)

    out = attention_fusion(patient_emb, atc4_emb, w1, b1, w2, b2)
    out = jax.block_until_ready(out)

    ref = attention_fusion_ref(patient_emb, atc4_emb, w1, b1, w2, b2)
    assert out.shape == (B, V)
    max_err = float(jnp.max(jnp.abs(out - ref)))
    assert jnp.allclose(out, ref, atol=1e-4, rtol=1e-4), f"max abs err = {max_err}"
    print("KERNEL_OK")
</pallas_src>

<mosaic_0001>
module attributes {stable_mosaic.version = 11 : i64} {
  func.func @_attention_fusion_kernel(%arg0: i32, %arg1: i32, %arg2: memref<32x4xf32, #tpu.memory_space<vmem>>, %arg3: memref<32x384xf32, #tpu.memory_space<vmem>>, %arg4: memref<1x32xf32, #tpu.memory_space<vmem>>, %arg5: memref<1x1xf32, #tpu.memory_space<smem>>, %arg6: memref<4x384xf32, #tpu.memory_space<vmem>>) attributes {dimension_semantics = [#tpu.dimension_semantics<parallel>, #tpu.dimension_semantics<arbitrary>], iteration_bounds = array<i64: 1, 1>, scalar_prefetch = 0 : i64, scratch_operands = 0 : i64, tpu.core_type = #tpu.core_type<tc>, window_params = [{transform_indices = @transform_0, window_bounds = array<i64: 32, 4>}, {transform_indices = @transform_1, window_bounds = array<i64: 32, 384>}, {pipeline_mode = #tpu.pipeline_mode<synchronous>, transform_indices = @transform_2, window_bounds = array<i64: 1, 32>}, {transform_indices = @transform_3, window_bounds = array<i64: 1, 1>}, {transform_indices = @transform_4, window_bounds = array<i64: 4, 384>}]} {
    %c0 = arith.constant 0 : index
    %c0_0 = arith.constant 0 : index
    %0 = vector.load %arg2[%c0, %c0_0] : memref<32x4xf32, #tpu.memory_space<vmem>>, vector<32x4xf32>
    %c0_1 = arith.constant 0 : index
    %c0_2 = arith.constant 0 : index
    %1 = vector.load %arg4[%c0_1, %c0_2] : memref<1x32xf32, #tpu.memory_space<vmem>>, vector<1x32xf32>
    %c0_3 = arith.constant 0 : index
    %c0_4 = arith.constant 0 : index
    %2 = memref.load %arg5[%c0_3, %c0_4] : memref<1x1xf32, #tpu.memory_space<smem>>
    %c0_5 = arith.constant 0 : index
    %c0_6 = arith.constant 0 : index
    %3 = vector.load %arg3[%c0_5, %c0_6] : memref<32x384xf32, #tpu.memory_space<vmem>>, vector<32x384xf32>
    %4 = vector.extract_strided_slice %0 {offsets = [0, 0], sizes = [32, 1], strides = [1, 1]} : vector<32x4xf32> to vector<32x1xf32>
    %5 = vector.broadcast %4 : vector<32x1xf32> to vector<32x384xf32>
    %6 = arith.addf %5, %3 : vector<32x384xf32>
    %7 = math.tanh %6 : vector<32x384xf32>
    %cst = arith.constant dense<0.000000e+00> : vector<1x384xf32>
    %8 = tpu.matmul %1, %7, %cst {dimension_numbers = #tpu.dot_dimension_numbers<[1], [0], [0], [1], [0, 0, 1, 1], [], []>, precision = #tpu.contract_precision<fp32>} : vector<1x32xf32>, vector<32x384xf32>, vector<1x384xf32> -> vector<1x384xf32>
    %9 = vector.broadcast %2 : f32 to vector<1x384xf32>
    %10 = arith.addf %8, %9 : vector<1x384xf32>
    %c0_7 = arith.constant 0 : index
    %c0_8 = arith.constant 0 : index
    %11 = vector.load %arg6[%c0_7, %c0_8] : memref<4x384xf32, #tpu.memory_space<vmem>>, vector<1x384xf32>
    tpu.vector_store %arg6[%c0_7, %c0_8], %10 {strides = array<i32>} : memref<4x384xf32, #tpu.memory_space<vmem>>, vector<1x384xf32>,
    %12 = vector.extract_strided_slice %0 {offsets = [0, 1], sizes = [32, 1], strides = [1, 1]} : vector<32x4xf32> to vector<32x1xf32>
    %13 = vector.broadcast %12 : vector<32x1xf32> to vector<32x384xf32>
    %14 = arith.addf %13, %3 : vector<32x384xf32>
    %15 = math.tanh %14 : vector<32x384xf32>
    %cst_9 = arith.constant dense<0.000000e+00> : vector<1x384xf32>
    %16 = tpu.matmul %1, %15, %cst_9 {dimension_numbers = #tpu.dot_dimension_numbers<[1], [0], [0], [1], [0, 0, 1, 1], [], []>, precision = #tpu.contract_precision<fp32>} : vector<1x32xf32>, vector<32x384xf32>, vector<1x384xf32> -> vector<1x384xf32>
    %17 = vector.broadcast %2 : f32 to vector<1x384xf32>
    %18 = arith.addf %16, %17 : vector<1x384xf32>
    %c1 = arith.constant 1 : index
    %c0_10 = arith.constant 0 : index
    %19 = vector.load %arg6[%c1, %c0_10] : memref<4x384xf32, #tpu.memory_space<vmem>>, vector<1x384xf32>
    tpu.vector_store %arg6[%c1, %c0_10], %18 {strides = array<i32>} : memref<4x384xf32, #tpu.memory_space<vmem>>, vector<1x384xf32>,
    %20 = vector.extract_strided_slice %0 {offsets = [0, 2], sizes = [32, 1], strides = [1, 1]} : vector<32x4xf32> to vector<32x1xf32>
    %21 = vector.broadcast %20 : vector<32x1xf32> to vector<32x384xf32>
    %22 = arith.addf %21, %3 : vector<32x384xf32>
    %23 = math.tanh %22 : vector<32x384xf32>
    %cst_11 = arith.constant dense<0.000000e+00> : vector<1x384xf32>
    %24 = tpu.matmul %1, %23, %cst_11 {dimension_numbers = #tpu.dot_dimension_numbers<[1], [0], [0], [1], [0, 0, 1, 1], [], []>, precision = #tpu.contract_precision<fp32>} : vector<1x32xf32>, vector<32x384xf32>, vector<1x384xf32> -> vector<1x384xf32>
    %25 = vector.broadcast %2 : f32 to vector<1x384xf32>
    %26 = arith.addf %24, %25 : vector<1x384xf32>
    %c2 = arith.constant 2 : index
    %c0_12 = arith.constant 0 : index
    %27 = vector.load %arg6[%c2, %c0_12] : memref<4x384xf32, #tpu.memory_space<vmem>>, vector<1x384xf32>
    tpu.vector_store %arg6[%c2, %c0_12], %26 {strides = array<i32>} : memref<4x384xf32, #tpu.memory_space<vmem>>, vector<1x384xf32>,
    %28 = vector.extract_strided_slice %0 {offsets = [0, 3], sizes = [32, 1], strides = [1, 1]} : vector<32x4xf32> to vector<32x1xf32>
    %29 = vector.broadcast %28 : vector<32x1xf32> to vector<32x384xf32>
    %30 = arith.addf %29, %3 : vector<32x384xf32>
    %31 = math.tanh %30 : vector<32x384xf32>
    %cst_13 = arith.constant dense<0.000000e+00> : vector<1x384xf32>
    %32 = tpu.matmul %1, %31, %cst_13 {dimension_numbers = #tpu.dot_dimension_numbers<[1], [0], [0], [1], [0, 0, 1, 1], [], []>, precision = #tpu.contract_precision<fp32>} : vector<1x32xf32>, vector<32x384xf32>, vector<1x384xf32> -> vector<1x384xf32>
    %33 = vector.broadcast %2 : f32 to vector<1x384xf32>
    %34 = arith.addf %32, %33 : vector<1x384xf32>
    %c3 = arith.constant 3 : index
    %c0_14 = arith.constant 0 : index
    %35 = vector.load %arg6[%c3, %c0_14] : memref<4x384xf32, #tpu.memory_space<vmem>>, vector<1x384xf32>
    tpu.vector_store %arg6[%c3, %c0_14], %34 {strides = array<i32>} : memref<4x384xf32, #tpu.memory_space<vmem>>, vector<1x384xf32>,
    return
  }
  func.func @transform_0(%arg0: i32, %arg1: i32) -> (i32, i32) {
    %c0_i32 = arith.constant 0 : i32
    %c0_i32_0 = arith.constant 0 : i32
    return %c0_i32, %arg1 : i32, i32
  }
  func.func @transform_1(%arg0: i32, %arg1: i32) -> (i32, i32) {
    %c0_i32 = arith.constant 0 : i32
    %c0_i32_0 = arith.constant 0 : i32
    return %c0_i32, %arg0 : i32, i32
  }
  func.func @transform_2(%arg0: i32, %arg1: i32) -> (i32, i32) {
    %c0_i32 = arith.constant 0 : i32
    %c0_i32_0 = arith.constant 0 : i32
    %c0_i32_1 = arith.constant 0 : i32
    return %c0_i32, %c0_i32_0 : i32, i32
  }
  func.func @transform_3(%arg0: i32, %arg1: i32) -> (i32, i32) {
    %c0_i32 = arith.constant 0 : i32
    %c0_i32_0 = arith.constant 0 : i32
    %c0_i32_1 = arith.constant 0 : i32
    return %c0_i32, %c0_i32_0 : i32, i32
  }
  func.func @transform_4(%arg0: i32, %arg1: i32) -> (i32, i32) {
    %c0_i32 = arith.constant 0 : i32
    return %arg1, %arg0 : i32, i32
  }
}

</mosaic_0001>

<llo_original>
// kernel: tpu_custom_call.1
$region0: #{tpu_custom_call.1}
  #allocation0 [shape = 'u32[]', space=smem, size = 0x4, offset = 0x4, fixed_abs, tag = 'smem constant byte address 0x4 - core index']
  #allocation1 [shape = 'u32[72,128]{1,0:T(1,128)}', space=vmem, size = 0x9000, scoped, tag = 'internal scratch']
  #allocation2 [shape = 'f32[1,1]{1,0:T(1,128)S(6)}', space=smem, size = 0x200, scoped, tag = 'scoped memory for tpu_custom_call.1']
  %s0 = inlined_call_operand.vmem [shape: f32[32,4], index: 0, kind: input, shape index: {}]
  %s1 = inlined_call_operand.hbm [shape: f32[32,300], index: 1, kind: input, shape index: {}]
  %s2 = inlined_call_operand.vmem [shape: f32[1,32], index: 2, kind: input, shape index: {}]
  %s3 = inlined_call_operand.<no memory space> [shape: f32[1,1], index: 3, kind: input, shape index: {}]
  %s4 = inlined_call_operand.hbm [shape: f32[4,300], index: 4, kind: output, shape index: {}]
  %s5 = sld [smem:[#allocation0]]
  $region30: #{tpu_custom_call.1} parent=0
    _
  %s7 = ssub.s32 1, %s5
  %s8 = scalar_select 0, %s7, %s5
  %9 = sst [smem:[#allocation2]] %s3
  $region1: #{tpu_custom_call.1} parent=0
    #allocation3 [shape = 'u8[49152]{0}', space=vmem, size = 0xc000, scoped, tag = 'input window, operand 1, single buffered']
    #allocation4 [shape = 's32[1]{0}', space=sflag, size = 0x4, scoped, tag = 'scoped memory for tpu_custom_call.1']
    #allocation5 [shape = 's32[1]{0}', space=sflag, size = 0x4, scoped, tag = 'scoped memory for tpu_custom_call.1']
    #allocation6 [shape = 'u8[6144]{0}', space=vmem, size = 0x1800, scoped, tag = 'output window, operand 0, single buffered']
    %10 = vsyncpa [#allocation4], 0
    %11 = vsyncpa [#allocation5], 0
    // Predicated region
    $region2: #{tpu_custom_call.1} parent=1 // pred_check
      _
    $region3: #{tpu_custom_call.1} parent=1 // pred_check_branch
      %13 = sbr.rel (0) target = $region5
    $region4: #{tpu_custom_call.1} parent=1 // pred_region
      _
    $region5: #{tpu_custom_call.1} parent=1 // pred_fallthru
      _
    // Predicated region
    $region6: #{tpu_custom_call.1} parent=1 // pred_check
      _
    $region7: #{tpu_custom_call.1} parent=1 // pred_check_branch
      %15 = sbr.rel (0) target = $region9
    $region8: #{tpu_custom_call.1} parent=1 // pred_region
      %17 = vsyncadd [#allocation4], 0
      %s18 = sshll.u32 %s1, 4
      %s19 = int_to_ptr.hbm [resolvable:$true] %s18
      %s20 = sshll.u32 [#allocation3], 4
      %s21 = int_to_ptr.vmem [resolvable:$true] %s20
      %26 = dma.hbm_to_vmem [thread:$0]  %s19, 1536, %s21, [#allocation4], 384, 384, 24
    $region9: #{tpu_custom_call.1} parent=1 // pred_fallthru
      _
    // Predicated region
    $region10: #{tpu_custom_call.1} parent=1 // pred_check
      _
    $region11: #{tpu_custom_call.1} parent=1 // pred_check_branch
      %28 = sbr.rel (0) target = $region13
    $region12: #{tpu_custom_call.1} parent=1 // pred_region
      _
    $region13: #{tpu_custom_call.1} parent=1 // pred_fallthru
      _
    // Predicated region
    $region14: #{tpu_custom_call.1} parent=1 // pred_check
      _
    $region15: #{tpu_custom_call.1} parent=1 // pred_check_branch
      %30 = sbr.rel (0) target = $region17
    $region16: #{tpu_custom_call.1} parent=1 // pred_region
      _
    $region17: #{tpu_custom_call.1} parent=1 // pred_fallthru
      _
    // Predicated region
    $region18: #{tpu_custom_call.1} parent=1 // pred_check
      _
    $region19: #{tpu_custom_call.1} parent=1 // pred_check_branch
      %32 = sbr.rel (0) target = $region21
    $region20: #{tpu_custom_call.1} parent=1 // pred_region
      %34 = dma.done [#allocation4], 1536
    $region21: #{tpu_custom_call.1} parent=1 // pred_fallthru
      _
    %v35 = vld [vmem:[%s0] sm:$0xff]
    %v36 = vld [vmem:[%s0 + $0x8] sm:$0xff]
    %v37 = vld [vmem:[%s0 + $0x10] sm:$0xff]
    %v38 = vld [vmem:[%s0 + $0x18] sm:$0xff]
    %v39 = vld [vmem:[%s2] sm:$0x1]
    %s40 = sld [smem:[#allocation2]]
    %v41 = vld [vmem:[#allocation3] sm:$0xff]
    %v42 = vld [vmem:[#allocation3 + $0x8] sm:$0xff]
    %v43 = vld [vmem:[#allocation3 + $0x10] sm:$0xff]
    %v44 = vld [vmem:[#allocation3 + $0x18] sm:$0xff]
    %v45 = vld [vmem:[#allocation3 + $0x20] sm:$0xff]
    %v46 = vld [vmem:[#allocation3 + $0x28] sm:$0xff]
    %v47 = vld [vmem:[#allocation3 + $0x30] sm:$0xff]
    %v48 = vld [vmem:[#allocation3 + $0x38] sm:$0xff]
    %v49 = vld [vmem:[#allocation3 + $0x40] sm:$0xff]
    %v50 = vld [vmem:[#allocation3 + $0x48] sm:$0xff]
    %v51 = vld [vmem:[#allocation3 + $0x50] sm:$0xff]
    %v52 = vld [vmem:[#allocation3 + $0x58] sm:$0xff]
    %54 = vset.pattern.permute.xlu0 0
    %55 = vperm.xlu0 %54, %v35
    %v56 = vpop.permute.xlu0 %55
    %59 = vset.pattern.permute.xlu0 0
    %60 = vperm.xlu0 %59, %v36
    %v61 = vpop.permute.xlu0 %60
    %64 = vset.pattern.permute.xlu0 0
    %65 = vperm.xlu0 %64, %v37
    %v66 = vpop.permute.xlu0 %65
    %69 = vset.pattern.permute.xlu0 0
    %70 = vperm.xlu0 %69, %v38
    %v71 = vpop.permute.xlu0 %70
    %v73 = vadd.f32 %v56, %v41
    %v74 = vadd.f32 %v56, %v42
    %v75 = vadd.f32 %v56, %v43
    %v76 = vadd.f32 %v61, %v44
    %v77 = vadd.f32 %v61, %v45
    %v78 = vadd.f32 %v61, %v46
    %v79 = vadd.f32 %v66, %v47
    %v80 = vadd.f32 %v66, %v48
    %v81 = vadd.f32 %v66, %v49
    %v82 = vadd.f32 %v71, %v50
    %v83 = vadd.f32 %v71, %v51
    %v84 = vadd.f32 %v71, %v52
    %v85 = vtanh.pop %v73
    %v86 = vtanh.pop %v74
    %v87 = vtanh.pop %v75
    %v88 = vtanh.pop %v76
    %v89 = vtanh.pop %v77
    %v90 = vtanh.pop %v78
    %v91 = vtanh.pop %v79
    %v92 = vtanh.pop %v80
    %v93 = vtanh.pop %v81
    %v94 = vtanh.pop %v82
    %v95 = vtanh.pop %v83
    %v96 = vtanh.pop %v84
    %v97 = vstv %s40
    %vm98 = vcmask 261120
    %v100 = vsel %vm98, %v39, 0
    %102 = vmatpush.msra.mxu0 0.0
    %103 = vmatpush.msra.mxu0 0.0
    %104 = vmatpush.msra.mxu0 0.0
    %105 = vmatpush.msra.mxu0 0.0
    %106 = vmatpush.msra.mxu0 0.0
    %107 = vmatpush.msra.mxu0 0.0
    %108 = vmatpush.msra.mxu0 0.0
    %109 = vmatpush.msra.mxu0 0.0
    %110 = vmatpush.msra.mxu0 0.0
    %111 = vmatpush.msra.mxu0 0.0
    %112 = vmatpush.msra.mxu0 0.0
    %113 = vmatpush.msra.mxu0 0.0
    %v114 = vand.u32 %v94, 4294901760
    %115 = vmatpush.msra.mxu0 %v114
    %v116 = vand.u32 %v91, 4294901760
    %117 = vmatpush.msra.mxu0 %v116
    %v118 = vand.u32 %v88, 4294901760
    %119 = vmatpush.msra.mxu0 %v118
    %v120 = vand.u32 %v85, 4294901760
    %121 = vmatpush.msra.mxu0 %v120
    %v122 = vand.u32 %v100, 4294901760
    %v123 = vsub.f32 %v100, %v122
    %v124 = vand.u32 %v123, 4294901760
    %v125 = vsub.f32 %v123, %v124
    %v126 = vand.u32 %v125, 4294901760
    %127 = vmatmul.f32.gmra.mxu0 %v126
    %v128 = vpop.f32.mrf.mxu0
    %v129 = vadd.f32 %v97, %v128
    %130 = vdwg.mxu0
    %131 = vmatpush.msra.mxu0 0.0
    %132 = vmatpush.msra.mxu0 0.0
    %133 = vmatpush.msra.mxu0 0.0
    %134 = vmatpush.msra.mxu0 0.0
    %135 = vmatpush.msra.mxu0 0.0
    %136 = vmatpush.msra.mxu0 0.0
    %137 = vmatpush.msra.mxu0 0.0
    %138 = vmatpush.msra.mxu0 0.0
    %139 = vmatpush.msra.mxu0 0.0
    %140 = vmatpush.msra.mxu0 0.0
    %141 = vmatpush.msra.mxu0 0.0
    %142 = vmatpush.msra.mxu0 0.0
    %v143 = vand.u32 %v94, 4294901760
    %v144 = vsub.f32 %v94, %v143
    %v145 = vand.u32 %v144, 4294901760
    %v146 = vsub.f32 %v144, %v145
    %v147 = vand.u32 %v146, 4294901760
    %148 = vmatpush.msra.mxu0 %v147
    %v149 = vand.u32 %v91, 4294901760
    %v150 = vsub.f32 %v91, %v149
    %v151 = vand.u32 %v150, 4294901760
    %v152 = vsub.f32 %v150, %v151
    %v153 = vand.u32 %v152, 4294901760
    %154 = vmatpush.msra.mxu0 %v153
    %v155 = vand.u32 %v88, 4294901760
    %v156 = vsub.f32 %v88, %v155
    %v157 = vand.u32 %v156, 4294901760
    %v158 = vsub.f32 %v156, %v157
    %v159 = vand.u32 %v158, 4294901760
    %160 = vmatpush.msra.mxu0 %v159
    %v161 = vand.u32 %v85, 4294901760
    %v162 = vsub.f32 %v85, %v161
    %v163 = vand.u32 %v162, 4294901760
    %v164 = vsub.f32 %v162, %v163
    %v165 = vand.u32 %v164, 4294901760
    %166 = vmatpush.msra.mxu0 %v165
    %v167 = vand.u32 %v100, 4294901760
    %168 = vmatmul.f32.gmra.mxu0 %v167
    %v169 = vpop.f32.mrf.mxu0
    %v170 = vadd.f32 %v129, %v169
    %171 = vdwg.mxu0
    %172 = vmatpush.msra.mxu0 0.0
    %173 = vmatpush.msra.mxu0 0.0
    %174 = vmatpush.msra.mxu0 0.0
    %175 = vmatpush.msra.mxu0 0.0
    %176 = vmatpush.msra.mxu0 0.0
    %177 = vmatpush.msra.mxu0 0.0
    %178 = vmatpush.msra.mxu0 0.0
    %179 = vmatpush.msra.mxu0 0.0
    %180 = vmatpush.msra.mxu0 0.0
    %181 = vmatpush.msra.mxu0 0.0
    %182 = vmatpush.msra.mxu0 0.0
    %183 = vmatpush.msra.mxu0 0.0
    %v184 = vand.u32 %v94, 4294901760
    %v185 = vsub.f32 %v94, %v184
    %186 = vmatpush.msra.mxu0 %v185
    %v187 = vand.u32 %v91, 4294901760
    %v188 = vsub.f32 %v91, %v187
    %189 = vmatpush.msra.mxu0 %v188
    %v190 = vand.u32 %v88, 4294901760
    %v191 = vsub.f32 %v88, %v190
    %192 = vmatpush.msra.mxu0 %v191
    %v193 = vand.u32 %v85, 4294901760
    %v194 = vsub.f32 %v85, %v193
    %195 = vmatpush.msra.mxu0 %v194
    %v196 = vand.u32 %v100, 4294901760
    %v197 = vsub.f32 %v100, %v196
    %198 = vmatmul.f32.gmra.mxu0 %v197
    %v199 = vpop.f32.mrf.mxu0
    %v200 = vadd.f32 %v170, %v199
    %201 = vdwg.mxu0
    %202 = vmatpush.msra.mxu0 0.0
    %203 = vmatpush.msra.mxu0 0.0
    %204 = vmatpush.msra.mxu0 0.0
    %205 = vmatpush.msra.mxu0 0.0
    %206 = vmatpush.msra.mxu0 0.0
    %207 = vmatpush.msra.mxu0 0.0
    %208 = vmatpush.msra.mxu0 0.0
    %209 = vmatpush.msra.mxu0 0.0
    %210 = vmatpush.msra.mxu0 0.0
    %211 = vmatpush.msra.mxu0 0.0
    %212 = vmatpush.msra.mxu0 0.0
    %213 = vmatpush.msra.mxu0 0.0
    %v214 = vand.u32 %v94, 4294901760
    %215 = vmatpush.msra.mxu0 %v214
    %v216 = vand.u32 %v91, 4294901760
    %217 = vmatpush.msra.mxu0 %v216
    %v218 = vand.u32 %v88, 4294901760
    %219 = vmatpush.msra.mxu0 %v218
    %v220 = vand.u32 %v85, 4294901760
    %221 = vmatpush.msra.mxu0 %v220
    %v222 = vand.u32 %v100, 4294901760
    %v223 = vsub.f32 %v100, %v222
    %v224 = vand.u32 %v223, 4294901760
    %225 = vmatmul.f32.gmra.mxu0 %v224
    %v226 = vpop.f32.mrf.mxu0
    %v227 = vadd.f32 %v200, %v226
    %228 = vdwg.mxu0
    %229 = vmatpush.msra.mxu0 0.0
    %230 = vmatpush.msra.mxu0 0.0
    %231 = vmatpush.msra.mxu0 0.0
    %232 = vmatpush.msra.mxu0 0.0
    %233 = vmatpush.msra.mxu0 0.0
    %234 = vmatpush.msra.mxu0 0.0
    %235 = vmatpush.msra.mxu0 0.0
    %236 = vmatpush.msra.mxu0 0.0
    %237 = vmatpush.msra.mxu0 0.0
    %238 = vmatpush.msra.mxu0 0.0
    %239 = vmatpush.msra.mxu0 0.0
    %240 = vmatpush.msra.mxu0 0.0
    %v241 = vand.u32 %v94, 4294901760
    %v242 = vsub.f32 %v94, %v241
    %v243 = vand.u32 %v242, 4294901760
    %244 = vmatpush.msra.mxu0 %v243
    %v245 = vand.u32 %v91, 4294901760
    %v246 = vsub.f32 %v91, %v245
    %v247 = vand.u32 %v246, 4294901760
    %248 = vmatpush.msra.mxu0 %v247
    %v249 = vand.u32 %v88, 4294901760
    %v250 = vsub.f32 %v88, %v249
    %v251 = vand.u32 %v250, 4294901760
    %252 = vmatpush.msra.mxu0 %v251
    %v253 = vand.u32 %v85, 4294901760
    %v254 = vsub.f32 %v85, %v253
    %v255 = vand.u32 %v254, 4294901760
    %256 = vmatpush.msra.mxu0 %v255
    %v257 = vand.u32 %v100, 4294901760
    %258 = vmatmul.f32.gmra.mxu0 %v257
    %v259 = vpop.f32.mrf.mxu0
    %v260 = vadd.f32 %v227, %v259
    %261 = vdwg.mxu0
    %262 = vmatpush.msra.mxu0 0.0
    %263 = vmatpush.msra.mxu0 0.0
    %264 = vmatpush.msra.mxu0 0.0
    %265 = vmatpush.msra.mxu0 0.0
    %266 = vmatpush.msra.mxu0 0.0
    %267 = vmatpush.msra.mxu0 0.0
    %268 = vmatpush.msra.mxu0 0.0
    %269 = vmatpush.msra.mxu0 0.0
    %270 = vmatpush.msra.mxu0 0.0
    %271 = vmatpush.msra.mxu0 0.0
    %272 = vmatpush.msra.mxu0 0.0
    %273 = vmatpush.msra.mxu0 0.0
    %v274 = vand.u32 %v94, 4294901760
    %275 = vmatpush.msra.mxu0 %v274
    %v276 = vand.u32 %v91, 4294901760
    %277 = vmatpush.msra.mxu0 %v276
    %v278 = vand.u32 %v88, 4294901760
    %279 = vmatpush.msra.mxu0 %v278
    %v280 = vand.u32 %v85, 4294901760
    %281 = vmatpush.msra.mxu0 %v280
    %v282 = vand.u32 %v100, 4294901760
    %283 = vmatmul.f32.gmra.mxu0 %v282
    %v284 = vpop.f32.mrf.mxu0
    %v285 = vadd.f32 %v260, %v284
    %286 = vdwg.mxu0
    %287 = vmatpush.msra.mxu0 0.0
    %288 = vmatpush.msra.mxu0 0.0
    %289 = vmatpush.msra.mxu0 0.0
    %290 = vmatpush.msra.mxu0 0.0
    %291 = vmatpush.msra.mxu0 0.0
    %292 = vmatpush.msra.mxu0 0.0
    %293 = vmatpush.msra.mxu0 0.0
    %294 = vmatpush.msra.mxu0 0.0
    %295 = vmatpush.msra.mxu0 0.0
    %296 = vmatpush.msra.mxu0 0.0
    %297 = vmatpush.msra.mxu0 0.0
    %298 = vmatpush.msra.mxu0 0.0
    %v299 = vand.u32 %v95, 4294901760
    %300 = vmatpush.msra.mxu0 %v299
    %v301 = vand.u32 %v92, 4294901760
    %302 = vmatpush.msra.mxu0 %v301
    %v303 = vand.u32 %v89, 4294901760
    %304 = vmatpush.msra.mxu0 %v303
    %v305 = vand.u32 %v86, 4294901760
    %306 = vmatpush.msra.mxu0 %v305
    %v307 = vand.u32 %v100, 4294901760
    %v308 = vsub.f32 %v100, %v307
    %v309 = vand.u32 %v308, 4294901760
    %v310 = vsub.f32 %v308, %v309
    %v311 = vand.u32 %v310, 4294901760
    %312 = vmatmul.f32.gmra.mxu0 %v311
    %v313 = vpop.f32.mrf.mxu0
    %v314 = vadd.f32 %v97, %v313
    %315 = vdwg.mxu0
    %316 = vmatpush.msra.mxu0 0.0
    %317 = vmatpush.msra.mxu0 0.0
    %318 = vmatpush.msra.mxu0 0.0
    %319 = vmatpush.msra.mxu0 0.0
    %320 = vmatpush.msra.mxu0 0.0
    %321 = vmatpush.msra.mxu0 0.0
    %322 = vmatpush.msra.mxu0 0.0
    %323 = vmatpush.msra.mxu0 0.0
    %324 = vmatpush.msra.mxu0 0.0
    %325 = vmatpush.msra.mxu0 0.0
    %326 = vmatpush.msra.mxu0 0.0
    %327 = vmatpush.msra.mxu0 0.0
    %v328 = vand.u32 %v95, 4294901760
    %v329 = vsub.f32 %v95, %v328
    %v330 = vand.u32 %v329, 4294901760
    %v331 = vsub.f32 %v329, %v330
    %v332 = vand.u32 %v331, 4294901760
    %333 = vmatpush.msra.mxu0 %v332
    %v334 = vand.u32 %v92, 4294901760
    %v335 = vsub.f32 %v92, %v334
    %v336 = vand.u32 %v335, 4294901760
    %v337 = vsub.f32 %v335, %v336
    %v338 = vand.u32 %v337, 4294901760
    %339 = vmatpush.msra.mxu0 %v338
    %v340 = vand.u32 %v89, 4294901760
    %v341 = vsub.f32 %v89, %v340
    %v342 = vand.u32 %v341, 4294901760
    %v343 = vsub.f32 %v341, %v342
    %v344 = vand.u32 %v343, 4294901760
    %345 = vmatpush.msra.mxu0 %v344
    %v346 = vand.u32 %v86, 4294901760
    %v347 = vsub.f32 %v86, %v346
    %v348 = vand.u32 %v347, 4294901760
    %v349 = vsub.f32 %v347, %v348
    %v350 = vand.u32 %v349, 4294901760
    %351 = vmatpush.msra.mxu0 %v350
    %v352 = vand.u32 %v100, 4294901760
    %353 = vmatmul.f32.gmra.mxu0 %v352
    %v354 = vpop.f32.mrf.mxu0
    %v355 = vadd.f32 %v314, %v354
    %356 = vdwg.mxu0
    %357 = vmatpush.msra.mxu0 0.0
    %358 = vmatpush.msra.mxu0 0.0
    %359 = vmatpush.msra.mxu0 0.0
    %360 = vmatpush.msra.mxu0 0.0
    %361 = vmatpush.msra.mxu0 0.0
    %362 = vmatpush.msra.mxu0 0.0
    %363 = vmatpush.msra.mxu0 0.0
    %364 = vmatpush.msra.mxu0 0.0
    %365 = vmatpush.msra.mxu0 0.0
    %366 = vmatpush.msra.mxu0 0.0
    %367 = vmatpush.msra.mxu0 0.0
    %368 = vmatpush.msra.mxu0 0.0
    %v369 = vand.u32 %v95, 4294901760
    %v370 = vsub.f32 %v95, %v369
    %371 = vmatpush.msra.mxu0 %v370
    %v372 = vand.u32 %v92, 4294901760
    %v373 = vsub.f32 %v92, %v372
    %374 = vmatpush.msra.mxu0 %v373
    %v375 = vand.u32 %v89, 4294901760
    %v376 = vsub.f32 %v89, %v375
    %377 = vmatpush.msra.mxu0 %v376
    %v378 = vand.u32 %v86, 4294901760
    %v379 = vsub.f32 %v86, %v378
    %380 = vmatpush.msra.mxu0 %v379
    %v381 = vand.u32 %v100, 4294901760
    %v382 = vsub.f32 %v100, %v381
    %383 = vmatmul.f32.gmra.mxu0 %v382
    %v384 = vpop.f32.mrf.mxu0
    %v385 = vadd.f32 %v355, %v384
    %386 = vdwg.mxu0
    %387 = vmatpush.msra.mxu0 0.0
    %388 = vmatpush.msra.mxu0 0.0
    %389 = vmatpush.msra.mxu0 0.0
    %390 = vmatpush.msra.mxu0 0.0
    %391 = vmatpush.msra.mxu0 0.0
    %392 = vmatpush.msra.mxu0 0.0
    %393 = vmatpush.msra.mxu0 0.0
    %394 = vmatpush.msra.mxu0 0.0
    %395 = vmatpush.msra.mxu0 0.0
    %396 = vmatpush.msra.mxu0 0.0
    %397 = vmatpush.msra.mxu0 0.0
    %398 = vmatpush.msra.mxu0 0.0
    %v399 = vand.u32 %v95, 4294901760
    %400 = vmatpush.msra.mxu0 %v399
    %v401 = vand.u32 %v92, 4294901760
    %402 = vmatpush.msra.mxu0 %v401
    %v403 = vand.u32 %v89, 4294901760
    %404 = vmatpush.msra.mxu0 %v403
    %v405 = vand.u32 %v86, 4294901760
    %406 = vmatpush.msra.mxu0 %v405
    %v407 = vand.u32 %v100, 4294901760
    %v408 = vsub.f32 %v100, %v407
    %v409 = vand.u32 %v408, 4294901760
    %410 = vmatmul.f32.gmra.mxu0 %v409
    %v411 = vpop.f32.mrf.mxu0
    %v412 = vadd.f32 %v385, %v411
    %413 = vdwg.mxu0
    %414 = vmatpush.msra.mxu0 0.0
    %415 = vmatpush.msra.mxu0 0.0
    %416 = vmatpush.msra.mxu0 0.0
    %417 = vmatpush.msra.mxu0 0.0
    %418 = vmatpush.msra.mxu0 0.0
    %419 = vmatpush.msra.mxu0 0.0
    %420 = vmatpush.msra.mxu0 0.0
    %421 = vmatpush.msra.mxu0 0.0
    %422 = vmatpush.msra.mxu0 0.0
    %423 = vmatpush.msra.mxu0 0.0
    %424 = vmatpush.msra.mxu0 0.0
    %425 = vmatpush.msra.mxu0 0.0
    %v426 = vand.u32 %v95, 4294901760
    %v427 = vsub.f32 %v95, %v426
    %v428 = vand.u32 %v427, 4294901760
    %429 = vmatpush.msra.mxu0 %v428
    %v430 = vand.u32 %v92, 4294901760
    %v431 = vsub.f32 %v92, %v430
    %v432 = vand.u32 %v431, 4294901760
    %433 = vmatpush.msra.mxu0 %v432
    %v434 = vand.u32 %v89, 4294901760
    %v435 = vsub.f32 %v89, %v434
    %v436 = vand.u32 %v435, 4294901760
    %437 = vmatpush.msra.mxu0 %v436
    %v438 = vand.u32 %v86, 4294901760
    %v439 = vsub.f32 %v86, %v438
    %v440 = vand.u32 %v439, 4294901760
    %441 = vmatpush.msra.mxu0 %v440
    %v442 = vand.u32 %v100, 4294901760
    %443 = vmatmul.f32.gmra.mxu0 %v442
    %v444 = vpop.f32.mrf.mxu0
    %v445 = vadd.f32 %v412, %v444
    %446 = vdwg.mxu0
    %447 = vmatpush.msra.mxu0 0.0
    %448 = vmatpush.msra.mxu0 0.0
    %449 = vmatpush.msra.mxu0 0.0
    %450 = vmatpush.msra.mxu0 0.0
    %451 = vmatpush.msra.mxu0 0.0
    %452 = vmatpush.msra.mxu0 0.0
    %453 = vmatpush.msra.mxu0 0.0
    %454 = vmatpush.msra.mxu0 0.0
    %455 = vmatpush.msra.mxu0 0.0
    %456 = vmatpush.msra.mxu0 0.0
    %457 = vmatpush.msra.mxu0 0.0
    %458 = vmatpush.msra.mxu0 0.0
    %v459 = vand.u32 %v95, 4294901760
    %460 = vmatpush.msra.mxu0 %v459
    %v461 = vand.u32 %v92, 4294901760
    %462 = vmatpush.msra.mxu0 %v461
    %v463 = vand.u32 %v89, 4294901760
    %464 = vmatpush.msra.mxu0 %v463
    %v465 = vand.u32 %v86, 4294901760
    %466 = vmatpush.msra.mxu0 %v465
    %v467 = vand.u32 %v100, 4294901760
    %468 = vmatmul.f32.gmra.mxu0 %v467
    %v469 = vpop.f32.mrf.mxu0
    %v470 = vadd.f32 %v445, %v469
    %471 = vdwg.mxu0
    %472 = vmatpush.msra.mxu0 0.0
    %473 = vmatpush.msra.mxu0 0.0
    %474 = vmatpush.msra.mxu0 0.0
    %475 = vmatpush.msra.mxu0 0.0
    %476 = vmatpush.msra.mxu0 0.0
    %477 = vmatpush.msra.mxu0 0.0
    %478 = vmatpush.msra.mxu0 0.0
    %479 = vmatpush.msra.mxu0 0.0
    %480 = vmatpush.msra.mxu0 0.0
    %481 = vmatpush.msra.mxu0 0.0
    %482 = vmatpush.msra.mxu0 0.0
    %483 = vmatpush.msra.mxu0 0.0
    %v484 = vand.u32 %v96, 4294901760
    %485 = vmatpush.msra.mxu0 %v484
    %v486 = vand.u32 %v93, 4294901760
    %487 = vmatpush.msra.mxu0 %v486
    %v488 = vand.u32 %v90, 4294901760
    %489 = vmatpush.msra.mxu0 %v488
    %v490 = vand.u32 %v87, 4294901760
    %491 = vmatpush.msra.mxu0 %v490
    %v492 = vand.u32 %v100, 4294901760
    %v493 = vsub.f32 %v100, %v492
    %v494 = vand.u32 %v493, 4294901760
    %v495 = vsub.f32 %v493, %v494
    %v496 = vand.u32 %v495, 4294901760
    %497 = vmatmul.f32.gmra.mxu0 %v496
    %v498 = vpop.f32.mrf.mxu0
    %v499 = vadd.f32 %v97, %v498
    %500 = vdwg.mxu0
    %501 = vmatpush.msra.mxu0 0.0
    %502 = vmatpush.msra.mxu0 0.0
    %503 = vmatpush.msra.mxu0 0.0
    %504 = vmatpush.msra.mxu0 0.0
    %505 = vmatpush.msra.mxu0 0.0
    %506 = vmatpush.msra.mxu0 0.0
    %507 = vmatpush.msra.mxu0 0.0
    %508 = vmatpush.msra.mxu0 0.0
    %509 = vmatpush.msra.mxu0 0.0
    %510 = vmatpush.msra.mxu0 0.0
    %511 = vmatpush.msra.mxu0 0.0
    %512 = vmatpush.msra.mxu0 0.0
    %v513 = vand.u32 %v96, 4294901760
    %v514 = vsub.f32 %v96, %v513
    %v515 = vand.u32 %v514, 4294901760
    %v516 = vsub.f32 %v514, %v515
    %v517 = vand.u32 %v516, 4294901760
    %518 = vmatpush.msra.mxu0 %v517
    %v519 = vand.u32 %v93, 4294901760
    %v520 = vsub.f32 %v93, %v519
    %v521 = vand.u32 %v520, 4294901760
    %v522 = vsub.f32 %v520, %v521
    %v523 = vand.u32 %v522, 4294901760
    %524 = vmatpush.msra.mxu0 %v523
    %v525 = vand.u32 %v90, 4294901760
    %v526 = vsub.f32 %v90, %v525
    %v527 = vand.u32 %v526, 4294901760
    %v528 = vsub.f32 %v526, %v527
    %v529 = vand.u32 %v528, 4294901760
    %530 = vmatpush.msra.mxu0 %v529
    %v531 = vand.u32 %v87, 4294901760
    %v532 = vsub.f32 %v87, %v531
    %v533 = vand.u32 %v532, 4294901760
    %v534 = vsub.f32 %v532, %v533
    %v535 = vand.u32 %v534, 4294901760
    %536 = vmatpush.msra.mxu0 %v535
    %v537 = vand.u32 %v100, 4294901760
    %538 = vmatmul.f32.gmra.mxu0 %v537
    %v539 = vpop.f32.mrf.mxu0
    %v540 = vadd.f32 %v499, %v539
    %541 = vdwg.mxu0
    %542 = vmatpush.msra.mxu0 0.0
    %543 = vmatpush.msra.mxu0 0.0
    %544 = vmatpush.msra.mxu0 0.0
    %545 = vmatpush.msra.mxu0 0.0
    %546 = vmatpush.msra.mxu0 0.0
    %547 = vmatpush.msra.mxu0 0.0
    %548 = vmatpush.msra.mxu0 0.0
    %549 = vmatpush.msra.mxu0 0.0
    %550 = vmatpush.msra.mxu0 0.0
    %551 = vmatpush.msra.mxu0 0.0
    %552 = vmatpush.msra.mxu0 0.0
    %553 = vmatpush.msra.mxu0 0.0
    %v554 = vand.u32 %v96, 4294901760
    %v555 = vsub.f32 %v96, %v554
    %556 = vmatpush.msra.mxu0 %v555
    %v557 = vand.u32 %v93, 4294901760
    %v558 = vsub.f32 %v93, %v557
    %559 = vmatpush.msra.mxu0 %v558
    %v560 = vand.u32 %v90, 4294901760
    %v561 = vsub.f32 %v90, %v560
    %562 = vmatpush.msra.mxu0 %v561
    %v563 = vand.u32 %v87, 4294901760
    %v564 = vsub.f32 %v87, %v563
    %565 = vmatpush.msra.mxu0 %v564
    %v566 = vand.u32 %v100, 4294901760
    %v567 = vsub.f32 %v100, %v566
    %568 = vmatmul.f32.gmra.mxu0 %v567
    %v569 = vpop.f32.mrf.mxu0
    %v570 = vadd.f32 %v540, %v569
    %571 = vdwg.mxu0
    %572 = vmatpush.msra.mxu0 0.0
    %573 = vmatpush.msra.mxu0 0.0
    %574 = vmatpush.msra.mxu0 0.0
    %575 = vmatpush.msra.mxu0 0.0
    %576 = vmatpush.msra.mxu0 0.0
    %577 = vmatpush.msra.mxu0 0.0
    %578 = vmatpush.msra.mxu0 0.0
    %579 = vmatpush.msra.mxu0 0.0
    %580 = vmatpush.msra.mxu0 0.0
    %581 = vmatpush.msra.mxu0 0.0
    %582 = vmatpush.msra.mxu0 0.0
    %583 = vmatpush.msra.mxu0 0.0
    %v584 = vand.u32 %v96, 4294901760
    %585 = vmatpush.msra.mxu0 %v584
    %v586 = vand.u32 %v93, 4294901760
    %587 = vmatpush.msra.mxu0 %v586
    %v588 = vand.u32 %v90, 4294901760
    %589 = vmatpush.msra.mxu0 %v588
    %v590 = vand.u32 %v87, 4294901760
    %591 = vmatpush.msra.mxu0 %v590
    %v592 = vand.u32 %v100, 4294901760
    %v593 = vsub.f32 %v100, %v592
    %v594 = vand.u32 %v593, 4294901760
    %595 = vmatmul.f32.gmra.mxu0 %v594
    %v596 = vpop.f32.mrf.mxu0
    %v597 = vadd.f32 %v570, %v596
    %598 = vdwg.mxu0
    %599 = vmatpush.msra.mxu0 0.0
    %600 = vmatpush.msra.mxu0 0.0
    %601 = vmatpush.msra.mxu0 0.0
    %602 = vmatpush.msra.mxu0 0.0
    %603 = vmatpush.msra.mxu0 0.0
    %604 = vmatpush.msra.mxu0 0.0
    %605 = vmatpush.msra.mxu0 0.0
    %606 = vmatpush.msra.mxu0 0.0
    %607 = vmatpush.msra.mxu0 0.0
    %608 = vmatpush.msra.mxu0 0.0
    %609 = vmatpush.msra.mxu0 0.0
    %610 = vmatpush.msra.mxu0 0.0
    %v611 = vand.u32 %v96, 4294901760
    %v612 = vsub.f32 %v96, %v611
    %v613 = vand.u32 %v612, 4294901760
    %614 = vmatpush.msra.mxu0 %v613
    %v615 = vand.u32 %v93, 4294901760
    %v616 = vsub.f32 %v93, %v615
    %v617 = vand.u32 %v616, 4294901760
    %618 = vmatpush.msra.mxu0 %v617
    %v619 = vand.u32 %v90, 4294901760
    %v620 = vsub.f32 %v90, %v619
    %v621 = vand.u32 %v620, 4294901760
    %622 = vmatpush.msra.mxu0 %v621
    %v623 = vand.u32 %v87, 4294901760
    %v624 = vsub.f32 %v87, %v623
    %v625 = vand.u32 %v624, 4294901760
    %626 = vmatpush.msra.mxu0 %v625
    %v627 = vand.u32 %v100, 4294901760
    %628 = vmatmul.f32.gmra.mxu0 %v627
    %v629 = vpop.f32.mrf.mxu0
    %v630 = vadd.f32 %v597, %v629
    %631 = vdwg.mxu0
    %632 = vmatpush.msra.mxu0 0.0
    %633 = vmatpush.msra.mxu0 0.0
    %634 = vmatpush.msra.mxu0 0.0
    %635 = vmatpush.msra.mxu0 0.0
    %636 = vmatpush.msra.mxu0 0.0
    %637 = vmatpush.msra.mxu0 0.0
    %638 = vmatpush.msra.mxu0 0.0
    %639 = vmatpush.msra.mxu0 0.0
    %640 = vmatpush.msra.mxu0 0.0
    %641 = vmatpush.msra.mxu0 0.0
    %642 = vmatpush.msra.mxu0 0.0
    %643 = vmatpush.msra.mxu0 0.0
    %v644 = vand.u32 %v96, 4294901760
    %645 = vmatpush.msra.mxu0 %v644
    %v646 = vand.u32 %v93, 4294901760
    %647 = vmatpush.msra.mxu0 %v646
    %v648 = vand.u32 %v90, 4294901760
    %649 = vmatpush.msra.mxu0 %v648
    %v650 = vand.u32 %v87, 4294901760
    %651 = vmatpush.msra.mxu0 %v650
    %v652 = vand.u32 %v100, 4294901760
    %653 = vmatmul.f32.gmra.mxu0 %v652
    %v654 = vpop.f32.mrf.mxu0
    %v655 = vadd.f32 %v630, %v654
    %656 = vdwg.mxu0
    %v660 = vrot.slane %v470, 7
    %v661 = vrot.slane %v655, 6
    %vm662 = vcmask 1040384
    %v663 = vsel %vm662, %v285, %v660
    %vm664 = vcmask 1041408
    %v665 = vsel %vm664, %v663, %v661
    %v667 = vlaneseq
    %vm668 = vcmp.ge.s32.totalorder %v667, 0
    %vm669 = vcmp.lt.s32.totalorder %v667, 384
    %vm670 = vmand %vm668, %vm669
    %671 = vst.msk [vmem:[#allocation6] ss:$4 sm:$0x7] %vm670, %v665
    %672 = vset.pattern.permute.xlu0 1
    %673 = vperm.xlu0 %672, %v35
    %v674 = vpop.permute.xlu0 %673
    %676 = vset.pattern.permute.xlu0 1
    %677 = vperm.xlu0 %676, %v36
    %v678 = vpop.permute.xlu0 %677
    %680 = vset.pattern.permute.xlu0 1
    %681 = vperm.xlu0 %680, %v37
    %v682 = vpop.permute.xlu0 %681
    %684 = vset.pattern.permute.xlu0 1
    %685 = vperm.xlu0 %684, %v38
    %v686 = vpop.permute.xlu0 %685
    %v688 = vadd.f32 %v674, %v41
    %v689 = vadd.f32 %v674, %v42
    %v690 = vadd.f32 %v674, %v43
    %v691 = vadd.f32 %v678, %v44
    %v692 = vadd.f32 %v678, %v45
    %v693 = vadd.f32 %v678, %v46
    %v694 = vadd.f32 %v682, %v47
    %v695 = vadd.f32 %v682, %v48
    %v696 = vadd.f32 %v682, %v49
    %v697 = vadd.f32 %v686, %v50
    %v698 = vadd.f32 %v686, %v51
    %v699 = vadd.f32 %v686, %v52
    %v700 = vtanh.pop %v688
    %v701 = vtanh.pop %v689
    %v702 = vtanh.pop %v690
    %v703 = vtanh.pop %v691
    %v704 = vtanh.pop %v692
    %v705 = vtanh.pop %v693
    %v706 = vtanh.pop %v694
    %v707 = vtanh.pop %v695
    %v708 = vtanh.pop %v696
    %v709 = vtanh.pop %v697
    %v710 = vtanh.pop %v698
    %v711 = vtanh.pop %v699
    %712 = vmatpush.msra.mxu0 0.0
    %713 = vmatpush.msra.mxu0 0.0
    %714 = vmatpush.msra.mxu0 0.0
    %715 = vmatpush.msra.mxu0 0.0
    %716 = vmatpush.msra.mxu0 0.0
    %717 = vmatpush.msra.mxu0 0.0
    %718 = vmatpush.msra.mxu0 0.0
    %719 = vmatpush.msra.mxu0 0.0
    %720 = vmatpush.msra.mxu0 0.0
    %721 = vmatpush.msra.mxu0 0.0
    %722 = vmatpush.msra.mxu0 0.0
    %723 = vmatpush.msra.mxu0 0.0
    %v724 = vand.u32 %v709, 4294901760
    %725 = vmatpush.msra.mxu0 %v724
    %v726 = vand.u32 %v706, 4294901760
    %727 = vmatpush.msra.mxu0 %v726
    %v728 = vand.u32 %v703, 4294901760
    %729 = vmatpush.msra.mxu0 %v728
    %v730 = vand.u32 %v700, 4294901760
    %731 = vmatpush.msra.mxu0 %v730
    %v732 = vand.u32 %v100, 4294901760
    %v733 = vsub.f32 %v100, %v732
    %v734 = vand.u32 %v733, 4294901760
    %v735 = vsub.f32 %v733, %v734
    %v736 = vand.u32 %v735, 4294901760
    %737 = vmatmul.f32.gmra.mxu0 %v736
    %v738 = vpop.f32.mrf.mxu0
    %v739 = vadd.f32 %v97, %v738
    %740 = vdwg.mxu0
    %741 = vmatpush.msra.mxu0 0.0
    %742 = vmatpush.msra.mxu0 0.0
    %743 = vmatpush.msra.mxu0 0.0
    %744 = vmatpush.msra.mxu0 0.0
    %745 = vmatpush.msra.mxu0 0.0
    %746 = vmatpush.msra.mxu0 0.0
    %747 = vmatpush.msra.mxu0 0.0
    %748 = vmatpush.msra.mxu0 0.0
    %749 = vmatpush.msra.mxu0 0.0
    %750 = vmatpush.msra.mxu0 0.0
    %751 = vmatpush.msra.mxu0 0.0
    %752 = vmatpush.msra.mxu0 0.0
    %v753 = vand.u32 %v709, 4294901760
    %v754 = vsub.f32 %v709, %v753
    %v755 = vand.u32 %v754, 4294901760
    %v756 = vsub.f32 %v754, %v755
    %v757 = vand.u32 %v756, 4294901760
    %758 = vmatpush.msra.mxu0 %v757
    %v759 = vand.u32 %v706, 4294901760
    %v760 = vsub.f32 %v706, %v759
    %v761 = vand.u32 %v760, 4294901760
    %v762 = vsub.f32 %v760, %v761
    %v763 = vand.u32 %v762, 4294901760
    %764 = vmatpush.msra.mxu0 %v763
    %v765 = vand.u32 %v703, 4294901760
    %v766 = vsub.f32 %v703, %v765
    %v767 = vand.u32 %v766, 4294901760
    %v768 = vsub.f32 %v766, %v767
    %v769 = vand.u32 %v768, 4294901760
    %770 = vmatpush.msra.mxu0 %v769
    %v771 = vand.u32 %v700, 4294901760
    %v772 = vsub.f32 %v700, %v771
    %v773 = vand.u32 %v772, 4294901760
    %v774 = vsub.f32 %v772, %v773
    %v775 = vand.u32 %v774, 4294901760
    %776 = vmatpush.msra.mxu0 %v775
    %v777 = vand.u32 %v100, 4294901760
    %778 = vmatmul.f32.gmra.mxu0 %v777
    %v779 = vpop.f32.mrf.mxu0
    %v780 = vadd.f32 %v739, %v779
    %781 = vdwg.mxu0
    %782 = vmatpush.msra.mxu0 0.0
    %783 = vmatpush.msra.mxu0 0.0
    %784 = vmatpush.msra.mxu0 0.0
    %785 = vmatpush.msra.mxu0 0.0
    %786 = vmatpush.msra.mxu0 0.0
    %787 = vmatpush.msra.mxu0 0.0
    %788 = vmatpush.msra.mxu0 0.0
    %789 = vmatpush.msra.mxu0 0.0
    %790 = vmatpush.msra.mxu0 0.0
    %791 = vmatpush.msra.mxu0 0.0
    %792 = vmatpush.msra.mxu0 0.0
    %793 = vmatpush.msra.mxu0 0.0
    %v794 = vand.u32 %v709, 4294901760
    %v795 = vsub.f32 %v709, %v794
    %796 = vmatpush.msra.mxu0 %v795
    %v797 = vand.u32 %v706, 4294901760
    %v798 = vsub.f32 %v706, %v797
    %799 = vmatpush.msra.mxu0 %v798
    %v800 = vand.u32 %v703, 4294901760
    %v801 = vsub.f32 %v703, %v800
    %802 = vmatpush.msra.mxu0 %v801
    %v803 = vand.u32 %v700, 4294901760
    %v804 = vsub.f32 %v700, %v803
    %805 = vmatpush.msra.mxu0 %v804
    %v806 = vand.u32 %v100, 4294901760
    %v807 = vsub.f32 %v100, %v806
    %808 = vmatmul.f32.gmra.mxu0 %v807
    %v809 = vpop.f32.mrf.mxu0
    %v810 = vadd.f32 %v780, %v809
    %811 = vdwg.mxu0
    %812 = vmatpush.msra.mxu0 0.0
    %813 = vmatpush.msra.mxu0 0.0
    %814 = vmatpush.msra.mxu0 0.0
    %815 = vmatpush.msra.mxu0 0.0
    %816 = vmatpush.msra.mxu0 0.0
    %817 = vmatpush.msra.mxu0 0.0
    %818 = vmatpush.msra.mxu0 0.0
    %819 = vmatpush.msra.mxu0 0.0
    %820 = vmatpush.msra.mxu0 0.0
    %821 = vmatpush.msra.mxu0 0.0
    %822 = vmatpush.msra.mxu0 0.0
    %823 = vmatpush.msra.mxu0 0.0
    %v824 = vand.u32 %v709, 4294901760
    %825 = vmatpush.msra.mxu0 %v824
    %v826 = vand.u32 %v706, 4294901760
    %827 = vmatpush.msra.mxu0 %v826
    %v828 = vand.u32 %v703, 4294901760
    %829 = vmatpush.msra.mxu0 %v828
    %v830 = vand.u32 %v700, 4294901760
    %831 = vmatpush.msra.mxu0 %v830
    %v832 = vand.u32 %v100, 4294901760
    %v833 = vsub.f32 %v100, %v832
    %v834 = vand.u32 %v833, 4294901760
    %835 = vmatmul.f32.gmra.mxu0 %v834
    %v836 = vpop.f32.mrf.mxu0
    %v837 = vadd.f32 %v810, %v836
    %838 = vdwg.mxu0
    %839 = vmatpush.msra.mxu0 0.0
    %840 = vmatpush.msra.mxu0 0.0
    %841 = vmatpush.msra.mxu0 0.0
    %842 = vmatpush.msra.mxu0 0.0
    %843 = vmatpush.msra.mxu0 0.0
    %844 = vmatpush.msra.mxu0 0.0
    %845 = vmatpush.msra.mxu0 0.0
    %846 = vmatpush.msra.mxu0 0.0
    %847 = vmatpush.msra.mxu0 0.0
    %848 = vmatpush.msra.mxu0 0.0
    %849 = vmatpush.msra.mxu0 0.0
    %850 = vmatpush.msra.mxu0 0.0
    %v851 = vand.u32 %v709, 4294901760
    %v852 = vsub.f32 %v709, %v851
    %v853 = vand.u32 %v852, 4294901760
    %854 = vmatpush.msra.mxu0 %v853
    %v855 = vand.u32 %v706, 4294901760
    %v856 = vsub.f32 %v706, %v855
    %v857 = vand.u32 %v856, 4294901760
    %858 = vmatpush.msra.mxu0 %v857
    %v859 = vand.u32 %v703, 4294901760
    %v860 = vsub.f32 %v703, %v859
    %v861 = vand.u32 %v860, 4294901760
    %862 = vmatpush.msra.mxu0 %v861
    %v863 = vand.u32 %v700, 4294901760
    %v864 = vsub.f32 %v700, %v863
    %v865 = vand.u32 %v864, 4294901760
    %866 = vmatpush.msra.mxu0 %v865
    %v867 = vand.u32 %v100, 4294901760
    %868 = vmatmul.f32.gmra.mxu0 %v867
    %v869 = vpop.f32.mrf.mxu0
    %v870 = vadd.f32 %v837, %v869
    %871 = vdwg.mxu0
    %872 = vmatpush.msra.mxu0 0.0
    %873 = vmatpush.msra.mxu0 0.0
    %874 = vmatpush.msra.mxu0 0.0
    %875 = vmatpush.msra.mxu0 0.0
    %876 = vmatpush.msra.mxu0 0.0
    %877 = vmatpush.msra.mxu0 0.0
    %878 = vmatpush.msra.mxu0 0.0
    %879 = vmatpush.msra.mxu0 0.0
    %880 = vmatpush.msra.mxu0 0.0
    %881 = vmatpush.msra.mxu0 0.0
    %882 = vmatpush.msra.mxu0 0.0
    %883 = vmatpush.msra.mxu0 0.0
    %v884 = vand.u32 %v709, 4294901760
    %885 = vmatpush.msra.mxu0 %v884
    %v886 = vand.u32 %v706, 4294901760
    %887 = vmatpush.msra.mxu0 %v886
    %v888 = vand.u32 %v703, 4294901760
    %889 = vmatpush.msra.mxu0 %v888
    %v890 = vand.u32 %v700, 4294901760
    %891 = vmatpush.msra.mxu0 %v890
    %v892 = vand.u32 %v100, 4294901760
    %893 = vmatmul.f32.gmra.mxu0 %v892
    %v894 = vpop.f32.mrf.mxu0
    %v895 = vadd.f32 %v870, %v894
    %896 = vdwg.mxu0
    %897 = vmatpush.msra.mxu0 0.0
    %898 = vmatpush.msra.mxu0 0.0
    %899 = vmatpush.msra.mxu0 0.0
    %900 = vmatpush.msra.mxu0 0.0
    %901 = vmatpush.msra.mxu0 0.0
    %902 = vmatpush.msra.mxu0 0.0
    %903 = vmatpush.msra.mxu0 0.0
    %904 = vmatpush.msra.mxu0 0.0
    %905 = vmatpush.msra.mxu0 0.0
    %906 = vmatpush.msra.mxu0 0.0
    %907 = vmatpush.msra.mxu0 0.0
    %908 = vmatpush.msra.mxu0 0.0
    %v909 = vand.u32 %v710, 4294901760
    %910 = vmatpush.msra.mxu0 %v909
    %v911 = vand.u32 %v707, 4294901760
    %912 = vmatpush.msra.mxu0 %v911
    %v913 = vand.u32 %v704, 4294901760
    %914 = vmatpush.msra.mxu0 %v913
    %v915 = vand.u32 %v701, 4294901760
    %916 = vmatpush.msra.mxu0 %v915
    %v917 = vand.u32 %v100, 4294901760
    %v918 = vsub.f32 %v100, %v917
    %v919 = vand.u32 %v918, 4294901760
    %v920 = vsub.f32 %v918, %v919
    %v921 = vand.u32 %v920, 4294901760
    %922 = vmatmul.f32.gmra.mxu0 %v921
    %v923 = vpop.f32.mrf.mxu0
    %v924 = vadd.f32 %v97, %v923
    %925 = vdwg.mxu0
    %926 = vmatpush.msra.mxu0 0.0
    %927 = vmatpush.msra.mxu0 0.0
    %928 = vmatpush.msra.mxu0 0.0
    %929 = vmatpush.msra.mxu0 0.0
    %930 = vmatpush.msra.mxu0 0.0
    %931 = vmatpush.msra.mxu0 0.0
    %932 = vmatpush.msra.mxu0 0.0
    %933 = vmatpush.msra.mxu0 0.0
    %934 = vmatpush.msra.mxu0 0.0
    %935 = vmatpush.msra.mxu0 0.0
    %936 = vmatpush.msra.mxu0 0.0
    %937 = vmatpush.msra.mxu0 0.0
    %v938 = vand.u32 %v710, 4294901760
    %v939 = vsub.f32 %v710, %v938
    %v940 = vand.u32 %v939, 4294901760
    %v941 = vsub.f32 %v939, %v940
    %v942 = vand.u32 %v941, 4294901760
    %943 = vmatpush.msra.mxu0 %v942
    %v944 = vand.u32 %v707, 4294901760
    %v945 = vsub.f32 %v707, %v944
    %v946 = vand.u32 %v945, 4294901760
    %v947 = vsub.f32 %v945, %v946
    %v948 = vand.u32 %v947, 4294901760
    %949 = vmatpush.msra.mxu0 %v948
    %v950 = vand.u32 %v704, 4294901760
    %v951 = vsub.f32 %v704, %v950
    %v952 = vand.u32 %v951, 4294901760
    %v953 = vsub.f32 %v951, %v952
    %v954 = vand.u32 %v953, 4294901760
    %955 = vmatpush.msra.mxu0 %v954
    %v956 = vand.u32 %v701, 4294901760
    %v957 = vsub.f32 %v701, %v956
    %v958 = vand.u32 %v957, 4294901760
    %v959 = vsub.f32 %v957, %v958
    %v960 = vand.u32 %v959, 4294901760
    %961 = vmatpush.msra.mxu0 %v960
    %v962 = vand.u32 %v100, 4294901760
    %963 = vmatmul.f32.gmra.mxu0 %v962
    %v964 = vpop.f32.mrf.mxu0
    %v965 = vadd.f32 %v924, %v964
    %966 = vdwg.mxu0
    %967 = vmatpush.msra.mxu0 0.0
    %968 = vmatpush.msra.mxu0 0.0
    %969 = vmatpush.msra.mxu0 0.0
    %970 = vmatpush.msra.mxu0 0.0
    %971 = vmatpush.msra.mxu0 0.0
    %972 = vmatpush.msra.mxu0 0.0
    %973 = vmatpush.msra.mxu0 0.0
    %974 = vmatpush.msra.mxu0 0.0
    %975 = vmatpush.msra.mxu0 0.0
    %976 = vmatpush.msra.mxu0 0.0
    %977 = vmatpush.msra.mxu0 0.0
    %978 = vmatpush.msra.mxu0 0.0
    %v979 = vand.u32 %v710, 4294901760
    %v980 = vsub.f32 %v710, %v979
    %981 = vmatpush.msra.mxu0 %v980
    %v982 = vand.u32 %v707, 4294901760
    %v983 = vsub.f32 %v707, %v982
    %984 = vmatpush.msra.mxu0 %v983
    %v985 = vand.u32 %v704, 4294901760
    %v986 = vsub.f32 %v704, %v985
    %987 = vmatpush.msra.mxu0 %v986
    %v988 = vand.u32 %v701, 4294901760
    %v989 = vsub.f32 %v701, %v988
    %990 = vmatpush.msra.mxu0 %v989
    %v991 = vand.u32 %v100, 4294901760
    %v992 = vsub.f32 %v100, %v991
    %993 = vmatmul.f32.gmra.mxu0 %v992
    %v994 = vpop.f32.mrf.mxu0
    %v995 = vadd.f32 %v965, %v994
    %996 = vdwg.mxu0
    %997 = vmatpush.msra.mxu0 0.0
    %998 = vmatpush.msra.mxu0 0.0
    %999 = vmatpush.msra.mxu0 0.0
    %1000 = vmatpush.msra.mxu0 0.0
    %1001 = vmatpush.msra.mxu0 0.0
    %1002 = vmatpush.msra.mxu0 0.0
    %1003 = vmatpush.msra.mxu0 0.0
    %1004 = vmatpush.msra.mxu0 0.0
    %1005 = vmatpush.msra.mxu0 0.0
    %1006 = vmatpush.msra.mxu0 0.0
    %1007 = vmatpush.msra.mxu0 0.0
    %1008 = vmatpush.msra.mxu0 0.0
    %v1009 = vand.u32 %v710, 4294901760
    %1010 = vmatpush.msra.mxu0 %v1009
    %v1011 = vand.u32 %v707, 4294901760
    %1012 = vmatpush.msra.mxu0 %v1011
    %v1013 = vand.u32 %v704, 4294901760
    %1014 = vmatpush.msra.mxu0 %v1013
    %v1015 = vand.u32 %v701, 4294901760
    %1016 = vmatpush.msra.mxu0 %v1015
    %v1017 = vand.u32 %v100, 4294901760
    %v1018 = vsub.f32 %v100, %v1017
    %v1019 = vand.u32 %v1018, 4294901760
    %1020 = vmatmul.f32.gmra.mxu0 %v1019
    %v1021 = vpop.f32.mrf.mxu0
    %v1022 = vadd.f32 %v995, %v1021
    %1023 = vdwg.mxu0
    %1024 = vmatpush.msra.mxu0 0.0
    %1025 = vmatpush.msra.mxu0 0.0
    %1026 = vmatpush.msra.mxu0 0.0
    %1027 = vmatpush.msra.mxu0 0.0
    %1028 = vmatpush.msra.mxu0 0.0
    %1029 = vmatpush.msra.mxu0 0.0
    %1030 = vmatpush.msra.mxu0 0.0
    %1031 = vmatpush.msra.mxu0 0.0
    %1032 = vmatpush.msra.mxu0 0.0
    %1033 = vmatpush.msra.mxu0 0.0
    %1034 = vmatpush.msra.mxu0 0.0
    %1035 = vmatpush.msra.mxu0 0.0
    %v1036 = vand.u32 %v710, 4294901760
    %v1037 = vsub.f32 %v710, %v1036
    %v1038 = vand.u32 %v1037, 4294901760
    %1039 = vmatpush.msra.mxu0 %v1038
    %v1040 = vand.u32 %v707, 4294901760
    %v1041 = vsub.f32 %v707, %v1040
    %v1042 = vand.u32 %v1041, 4294901760
    %1043 = vmatpush.msra.mxu0 %v1042
    %v1044 = vand.u32 %v704, 4294901760
    %v1045 = vsub.f32 %v704, %v1044
    %v1046 = vand.u32 %v1045, 4294901760
    %1047 = vmatpush.msra.mxu0 %v1046
    %v1048 = vand.u32 %v701, 4294901760
    %v1049 = vsub.f32 %v701, %v1048
    %v1050 = vand.u32 %v1049, 4294901760
    %1051 = vmatpush.msra.mxu0 %v1050
    %v1052 = vand.u32 %v100, 4294901760
    %1053 = vmatmul.f32.gmra.mxu0 %v1052
    %v1054 = vpop.f32.mrf.mxu0
    %v1055 = vadd.f32 %v1022, %v1054
    %1056 = vdwg.mxu0
    %1057 = vmatpush.msra.mxu0 0.0
    %1058 = vmatpush.msra.mxu0 0.0
    %1059 = vmatpush.msra.mxu0 0.0
    %1060 = vmatpush.msra.mxu0 0.0
    %1061 = vmatpush.msra.mxu0 0.0
    %1062 = vmatpush.msra.mxu0 0.0
    %1063 = vmatpush.msra.mxu0 0.0
    %1064 = vmatpush.msra.mxu0 0.0
    %1065 = vmatpush.msra.mxu0 0.0
    %1066 = vmatpush.msra.mxu0 0.0
    %1067 = vmatpush.msra.mxu0 0.0
    %1068 = vmatpush.msra.mxu0 0.0
    %v1069 = vand.u32 %v710, 4294901760
    %1070 = vmatpush.msra.mxu0 %v1069
    %v1071 = vand.u32 %v707, 4294901760
    %1072 = vmatpush.msra.mxu0 %v1071
    %v1073 = vand.u32 %v704, 4294901760
    %1074 = vmatpush.msra.mxu0 %v1073
    %v1075 = vand.u32 %v701, 4294901760
    %1076 = vmatpush.msra.mxu0 %v1075
    %v1077 = vand.u32 %v100, 4294901760
    %1078 = vmatmul.f32.gmra.mxu0 %v1077
    %v1079 = vpop.f32.mrf.mxu0
    %v1080 = vadd.f32 %v1055, %v1079
    %1081 = vdwg.mxu0
    %1082 = vmatpush.msra.mxu0 0.0
    %1083 = vmatpush.msra.mxu0 0.0
    %1084 = vmatpush.msra.mxu0 0.0
    %1085 = vmatpush.msra.mxu0 0.0
    %1086 = vmatpush.msra.mxu0 0.0
    %1087 = vmatpush.msra.mxu0 0.0
    %1088 = vmatpush.msra.mxu0 0.0
    %1089 = vmatpush.msra.mxu0 0.0
    %1090 = vmatpush.msra.mxu0 0.0
    %1091 = vmatpush.msra.mxu0 0.0
    %1092 = vmatpush.msra.mxu0 0.0
    %1093 = vmatpush.msra.mxu0 0.0
    %v1094 = vand.u32 %v711, 4294901760
    %1095 = vmatpush.msra.mxu0 %v1094
    %v1096 = vand.u32 %v708, 4294901760
    %1097 = vmatpush.msra.mxu0 %v1096
    %v1098 = vand.u32 %v705, 4294901760
    %1099 = vmatpush.msra.mxu0 %v1098
    %v1100 = vand.u32 %v702, 4294901760
    %1101 = vmatpush.msra.mxu0 %v1100
    %v1102 = vand.u32 %v100, 4294901760
    %v1103 = vsub.f32 %v100, %v1102
    %v1104 = vand.u32 %v1103, 4294901760
    %v1105 = vsub.f32 %v1103, %v1104
    %v1106 = vand.u32 %v1105, 4294901760
    %1107 = vmatmul.f32.gmra.mxu0 %v1106
    %v1108 = vpop.f32.mrf.mxu0
    %v1109 = vadd.f32 %v97, %v1108
    %1110 = vdwg.mxu0
    %1111 = vmatpush.msra.mxu0 0.0
    %1112 = vmatpush.msra.mxu0 0.0
    %1113 = vmatpush.msra.mxu0 0.0
    %1114 = vmatpush.msra.mxu0 0.0
    %1115 = vmatpush.msra.mxu0 0.0
    %1116 = vmatpush.msra.mxu0 0.0
    %1117 = vmatpush.msra.mxu0 0.0
    %1118 = vmatpush.msra.mxu0 0.0
    %1119 = vmatpush.msra.mxu0 0.0
    %1120 = vmatpush.msra.mxu0 0.0
    %1121 = vmatpush.msra.mxu0 0.0
    %1122 = vmatpush.msra.mxu0 0.0
    %v1123 = vand.u32 %v711, 4294901760
    %v1124 = vsub.f32 %v711, %v1123
    %v1125 = vand.u32 %v1124, 4294901760
    %v1126 = vsub.f32 %v1124, %v1125
    %v1127 = vand.u32 %v1126, 4294901760
    %1128 = vmatpush.msra.mxu0 %v1127
    %v1129 = vand.u32 %v708, 4294901760
    %v1130 = vsub.f32 %v708, %v1129
    %v1131 = vand.u32 %v1130, 4294901760
    %v1132 = vsub.f32 %v1130, %v1131
    %v1133 = vand.u32 %v1132, 4294901760
    %1134 = vmatpush.msra.mxu0 %v1133
    %v1135 = vand.u32 %v705, 4294901760
    %v1136 = vsub.f32 %v705, %v1135
    %v1137 = vand.u32 %v1136, 4294901760
    %v1138 = vsub.f32 %v1136, %v1137
    %v1139 = vand.u32 %v1138, 4294901760
    %1140 = vmatpush.msra.mxu0 %v1139
    %v1141 = vand.u32 %v702, 4294901760
    %v1142 = vsub.f32 %v702, %v1141
    %v1143 = vand.u32 %v1142, 4294901760
    %v1144 = vsub.f32 %v1142, %v1143
    %v1145 = vand.u32 %v1144, 4294901760
    %1146 = vmatpush.msra.mxu0 %v1145
    %v1147 = vand.u32 %v100, 4294901760
    %1148 = vmatmul.f32.gmra.mxu0 %v1147
    %v1149 = vpop.f32.mrf.mxu0
    %v1150 = vadd.f32 %v1109, %v1149
    %1151 = vdwg.mxu0
    %1152 = vmatpush.msra.mxu0 0.0
    %1153 = vmatpush.msra.mxu0 0.0
    %1154 = vmatpush.msra.mxu0 0.0
    %1155 = vmatpush.msra.mxu0 0.0
    %1156 = vmatpush.msra.mxu0 0.0
    %1157 = vmatpush.msra.mxu0 0.0
    %1158 = vmatpush.msra.mxu0 0.0
    %1159 = vmatpush.msra.mxu0 0.0
    %1160 = vmatpush.msra.mxu0 0.0
    %1161 = vmatpush.msra.mxu0 0.0
    %1162 = vmatpush.msra.mxu0 0.0
    %1163 = vmatpush.msra.mxu0 0.0
    %v1164 = vand.u32 %v711, 4294901760
    %v1165 = vsub.f32 %v711, %v1164
    %1166 = vmatpush.msra.mxu0 %v1165
    %v1167 = vand.u32 %v708, 4294901760
    %v1168 = vsub.f32 %v708, %v1167
    %1169 = vmatpush.msra.mxu0 %v1168
    %v1170 = vand.u32 %v705, 4294901760
    %v1171 = vsub.f32 %v705, %v1170
    %1172 = vmatpush.msra.mxu0 %v1171
    %v1173 = vand.u32 %v702, 4294901760
    %v1174 = vsub.f32 %v702, %v1173
    %1175 = vmatpush.msra.mxu0 %v1174
    %v1176 = vand.u32 %v100, 4294901760
    %v1177 = vsub.f32 %v100, %v1176
    %1178 = vmatmul.f32.gmra.mxu0 %v1177
    %v1179 = vpop.f32.mrf.mxu0
    %v1180 = vadd.f32 %v1150, %v1179
    %1181 = vdwg.mxu0
    %1182 = vmatpush.msra.mxu0 0.0
    %1183 = vmatpush.msra.mxu0 0.0
    %1184 = vmatpush.msra.mxu0 0.0
    %1185 = vmatpush.msra.mxu0 0.0
    %1186 = vmatpush.msra.mxu0 0.0
    %1187 = vmatpush.msra.mxu0 0.0
    %1188 = vmatpush.msra.mxu0 0.0
    %1189 = vmatpush.msra.mxu0 0.0
    %1190 = vmatpush.msra.mxu0 0.0
    %1191 = vmatpush.msra.mxu0 0.0
    %1192 = vmatpush.msra.mxu0 0.0
    %1193 = vmatpush.msra.mxu0 0.0
    %v1194 = vand.u32 %v711, 4294901760
    %1195 = vmatpush.msra.mxu0 %v1194
    %v1196 = vand.u32 %v708, 4294901760
    %1197 = vmatpush.msra.mxu0 %v1196
    %v1198 = vand.u32 %v705, 4294901760
    %1199 = vmatpush.msra.mxu0 %v1198
    %v1200 = vand.u32 %v702, 4294901760
    %1201 = vmatpush.msra.mxu0 %v1200
    %v1202 = vand.u32 %v100, 4294901760
    %v1203 = vsub.f32 %v100, %v1202
    %v1204 = vand.u32 %v1203, 4294901760
    %1205 = vmatmul.f32.gmra.mxu0 %v1204
    %v1206 = vpop.f32.mrf.mxu0
    %v1207 = vadd.f32 %v1180, %v1206
    %1208 = vdwg.mxu0
    %1209 = vmatpush.msra.mxu0 0.0
    %1210 = vmatpush.msra.mxu0 0.0
    %1211 = vmatpush.msra.mxu0 0.0
    %1212 = vmatpush.msra.mxu0 0.0
    %1213 = vmatpush.msra.mxu0 0.0
    %1214 = vmatpush.msra.mxu0 0.0
    %1215 = vmatpush.msra.mxu0 0.0
    %1216 = vmatpush.msra.mxu0 0.0
    %1217 = vmatpush.msra.mxu0 0.0
    %1218 = vmatpush.msra.mxu0 0.0
    %1219 = vmatpush.msra.mxu0 0.0
    %1220 = vmatpush.msra.mxu0 0.0
    %v1221 = vand.u32 %v711, 4294901760
    %v1222 = vsub.f32 %v711, %v1221
    %v1223 = vand.u32 %v1222, 4294901760
    %1224 = vmatpush.msra.mxu0 %v1223
    %v1225 = vand.u32 %v708, 4294901760
    %v1226 = vsub.f32 %v708, %v1225
    %v1227 = vand.u32 %v1226, 4294901760
    %1228 = vmatpush.msra.mxu0 %v1227
    %v1229 = vand.u32 %v705, 4294901760
    %v1230 = vsub.f32 %v705, %v1229
    %v1231 = vand.u32 %v1230, 4294901760
    %1232 = vmatpush.msra.mxu0 %v1231
    %v1233 = vand.u32 %v702, 4294901760
    %v1234 = vsub.f32 %v702, %v1233
    %v1235 = vand.u32 %v1234, 4294901760
    %1236 = vmatpush.msra.mxu0 %v1235
    %v1237 = vand.u32 %v100, 4294901760
    %1238 = vmatmul.f32.gmra.mxu0 %v1237
    %v1239 = vpop.f32.mrf.mxu0
    %v1240 = vadd.f32 %v1207, %v1239
    %1241 = vdwg.mxu0
    %1242 = vmatpush.msra.mxu0 0.0
    %1243 = vmatpush.msra.mxu0 0.0
    %1244 = vmatpush.msra.mxu0 0.0
    %1245 = vmatpush.msra.mxu0 0.0
    %1246 = vmatpush.msra.mxu0 0.0
    %1247 = vmatpush.msra.mxu0 0.0
    %1248 = vmatpush.msra.mxu0 0.0
    %1249 = vmatpush.msra.mxu0 0.0
    %1250 = vmatpush.msra.mxu0 0.0
    %1251 = vmatpush.msra.mxu0 0.0
    %1252 = vmatpush.msra.mxu0 0.0
    %1253 = vmatpush.msra.mxu0 0.0
    %v1254 = vand.u32 %v711, 4294901760
    %1255 = vmatpush.msra.mxu0 %v1254
    %v1256 = vand.u32 %v708, 4294901760
    %1257 = vmatpush.msra.mxu0 %v1256
    %v1258 = vand.u32 %v705, 4294901760
    %1259 = vmatpush.msra.mxu0 %v1258
    %v1260 = vand.u32 %v702, 4294901760
    %1261 = vmatpush.msra.mxu0 %v1260
    %v1262 = vand.u32 %v100, 4294901760
    %1263 = vmatmul.f32.gmra.mxu0 %v1262
    %v1264 = vpop.f32.mrf.mxu0
    %v1265 = vadd.f32 %v1240, %v1264
    %1266 = vdwg.mxu0
    %v1270 = vrot.slane %v1080, 7
    %v1271 = vrot.slane %v1265, 6
    %v1272 = vsel %vm662, %v895, %v1270
    %v1273 = vsel %vm664, %v1272, %v1271
    %s1275 = scalar_lea.vmem [#allocation6], 1
    %1276 = vst.msk [vmem:[%s1275] ss:$4 sm:$0x7] %vm670, %v1273
    %1277 = vset.pattern.permute.xlu0 2
    %1278 = vperm.xlu0 %1277, %v35
    %v1279 = vpop.permute.xlu0 %1278
    %1281 = vset.pattern.permute.xlu0 2
    %1282 = vperm.xlu0 %1281, %v36
    %v1283 = vpop.permute.xlu0 %1282
    %1285 = vset.pattern.permute.xlu0 2
    %1286 = vperm.xlu0 %1285, %v37
    %v1287 = vpop.permute.xlu0 %1286
    %1289 = vset.pattern.permute.xlu0 2
    %1290 = vperm.xlu0 %1289, %v38
    %v1291 = vpop.permute.xlu0 %1290
    %v1293 = vadd.f32 %v1279, %v41
    %v1294 = vadd.f32 %v1279, %v42
    %v1295 = vadd.f32 %v1279, %v43
    %v1296 = vadd.f32 %v1283, %v44
    %v1297 = vadd.f32 %v1283, %v45
    %v1298 = vadd.f32 %v1283, %v46
    %v1299 = vadd.f32 %v1287, %v47
    %v1300 = vadd.f32 %v1287, %v48
    %v1301 = vadd.f32 %v1287, %v49
    %v1302 = vadd.f32 %v1291, %v50
    %v1303 = vadd.f32 %v1291, %v51
    %v1304 = vadd.f32 %v1291, %v52
    %v1305 = vtanh.pop %v1293
    %v1306 = vtanh.pop %v1294
    %v1307 = vtanh.pop %v1295
    %v1308 = vtanh.pop %v1296
    %v1309 = vtanh.pop %v1297
    %v1310 = vtanh.pop %v1298
    %v1311 = vtanh.pop %v1299
    %v1312 = vtanh.pop %v1300
    %v1313 = vtanh.pop %v1301
    %v1314 = vtanh.pop %v1302
    %v1315 = vtanh.pop %v1303
    %v1316 = vtanh.pop %v1304
    %1317 = vmatpush.msra.mxu0 0.0
    %1318 = vmatpush.msra.mxu0 0.0
    %1319 = vmatpush.msra.mxu0 0.0
    %1320 = vmatpush.msra.mxu0 0.0
    %1321 = vmatpush.msra.mxu0 0.0
    %1322 = vmatpush.msra.mxu0 0.0
    %1323 = vmatpush.msra.mxu0 0.0
    %1324 = vmatpush.msra.mxu0 0.0
    %1325 = vmatpush.msra.mxu0 0.0
    %1326 = vmatpush.msra.mxu0 0.0
    %1327 = vmatpush.msra.mxu0 0.0
    %1328 = vmatpush.msra.mxu0 0.0
    %v1329 = vand.u32 %v1314, 4294901760
    %1330 = vmatpush.msra.mxu0 %v1329
    %v1331 = vand.u32 %v1311, 4294901760
    %1332 = vmatpush.msra.mxu0 %v1331
    %v1333 = vand.u32 %v1308, 4294901760
    %1334 = vmatpush.msra.mxu0 %v1333
    %v1335 = vand.u32 %v1305, 4294901760
    %1336 = vmatpush.msra.mxu0 %v1335
    %v1337 = vand.u32 %v100, 4294901760
    %v1338 = vsub.f32 %v100, %v1337
    %v1339 = vand.u32 %v1338, 4294901760
    %v1340 = vsub.f32 %v1338, %v1339
    %v1341 = vand.u32 %v1340, 4294901760
    %1342 = vmatmul.f32.gmra.mxu0 %v1341
    %v1343 = vpop.f32.mrf.mxu0
    %v1344 = vadd.f32 %v97, %v1343
    %1345 = vdwg.mxu0
    %1346 = vmatpush.msra.mxu0 0.0
    %1347 = vmatpush.msra.mxu0 0.0
    %1348 = vmatpush.msra.mxu0 0.0
    %1349 = vmatpush.msra.mxu0 0.0
    %1350 = vmatpush.msra.mxu0 0.0
    %1351 = vmatpush.msra.mxu0 0.0
    %1352 = vmatpush.msra.mxu0 0.0
    %1353 = vmatpush.msra.mxu0 0.0
    %1354 = vmatpush.msra.mxu0 0.0
    %1355 = vmatpush.msra.mxu0 0.0
    %1356 = vmatpush.msra.mxu0 0.0
    %1357 = vmatpush.msra.mxu0 0.0
    %v1358 = vand.u32 %v1314, 4294901760
    %v1359 = vsub.f32 %v1314, %v1358
    %v1360 = vand.u32 %v1359, 4294901760
    %v1361 = vsub.f32 %v1359, %v1360
    %v1362 = vand.u32 %v1361, 4294901760
    %1363 = vmatpush.msra.mxu0 %v1362
    %v1364 = vand.u32 %v1311, 4294901760
    %v1365 = vsub.f32 %v1311, %v1364
    %v1366 = vand.u32 %v1365, 4294901760
    %v1367 = vsub.f32 %v1365, %v1366
    %v1368 = vand.u32 %v1367, 4294901760
    %1369 = vmatpush.msra.mxu0 %v1368
    %v1370 = vand.u32 %v1308, 4294901760
    %v1371 = vsub.f32 %v1308, %v1370
    %v1372 = vand.u32 %v1371, 4294901760
    %v1373 = vsub.f32 %v1371, %v1372
    %v1374 = vand.u32 %v1373, 4294901760
    %1375 = vmatpush.msra.mxu0 %v1374
    %v1376 = vand.u32 %v1305, 4294901760
    %v1377 = vsub.f32 %v1305, %v1376
    %v1378 = vand.u32 %v1377, 4294901760
    %v1379 = vsub.f32 %v1377, %v1378
    %v1380 = vand.u32 %v1379, 4294901760
    %1381 = vmatpush.msra.mxu0 %v1380
    %v1382 = vand.u32 %v100, 4294901760
    %1383 = vmatmul.f32.gmra.mxu0 %v1382
    %v1384 = vpop.f32.mrf.mxu0
    %v1385 = vadd.f32 %v1344, %v1384
    %1386 = vdwg.mxu0
    %1387 = vmatpush.msra.mxu0 0.0
    %1388 = vmatpush.msra.mxu0 0.0
    %1389 = vmatpush.msra.mxu0 0.0
    %1390 = vmatpush.msra.mxu0 0.0
    %1391 = vmatpush.msra.mxu0 0.0
    %1392 = vmatpush.msra.mxu0 0.0
    %1393 = vmatpush.msra.mxu0 0.0
    %1394 = vmatpush.msra.mxu0 0.0
    %1395 = vmatpush.msra.mxu0 0.0
    %1396 = vmatpush.msra.mxu0 0.0
    %1397 = vmatpush.msra.mxu0 0.0
    %1398 = vmatpush.msra.mxu0 0.0
    %v1399 = vand.u32 %v1314, 4294901760
    %v1400 = vsub.f32 %v1314, %v1399
    %1401 = vmatpush.msra.mxu0 %v1400
    %v1402 = vand.u32 %v1311, 4294901760
    %v1403 = vsub.f32 %v1311, %v1402
    %1404 = vmatpush.msra.mxu0 %v1403
    %v1405 = vand.u32 %v1308, 4294901760
    %v1406 = vsub.f32 %v1308, %v1405
    %1407 = vmatpush.msra.mxu0 %v1406
    %v1408 = vand.u32 %v1305, 4294901760
    %v1409 = vsub.f32 %v1305, %v1408
    %1410 = vmatpush.msra.mxu0 %v1409
    %v1411 = vand.u32 %v100, 4294901760
    %v1412 = vsub.f32 %v100, %v1411
    %1413 = vmatmul.f32.gmra.mxu0 %v1412
    %v1414 = vpop.f32.mrf.mxu0
    %v1415 = vadd.f32 %v1385, %v1414
    %1416 = vdwg.mxu0
    %1417 = vmatpush.msra.mxu0 0.0
    %1418 = vmatpush.msra.mxu0 0.0
    %1419 = vmatpush.msra.mxu0 0.0
    %1420 = vmatpush.msra.mxu0 0.0
    %1421 = vmatpush.msra.mxu0 0.0
    %1422 = vmatpush.msra.mxu0 0.0
    %1423 = vmatpush.msra.mxu0 0.0
    %1424 = vmatpush.msra.mxu0 0.0
    %1425 = vmatpush.msra.mxu0 0.0
    %1426 = vmatpush.msra.mxu0 0.0
    %1427 = vmatpush.msra.mxu0 0.0
    %1428 = vmatpush.msra.mxu0 0.0
    %v1429 = vand.u32 %v1314, 4294901760
    %1430 = vmatpush.msra.mxu0 %v1429
    %v1431 = vand.u32 %v1311, 4294901760
    %1432 = vmatpush.msra.mxu0 %v1431
    %v1433 = vand.u32 %v1308, 4294901760
    %1434 = vmatpush.msra.mxu0 %v1433
    %v1435 = vand.u32 %v1305, 4294901760
    %1436 = vmatpush.msra.mxu0 %v1435
    %v1437 = vand.u32 %v100, 4294901760
    %v1438 = vsub.f32 %v100, %v1437
    %v1439 = vand.u32 %v1438, 4294901760
    %1440 = vmatmul.f32.gmra.mxu0 %v1439
    %v1441 = vpop.f32.mrf.mxu0
    %v1442 = vadd.f32 %v1415, %v1441
    %1443 = vdwg.mxu0
    %1444 = vmatpush.msra.mxu0 0.0
    %1445 = vmatpush.msra.mxu0 0.0
    %1446 = vmatpush.msra.mxu0 0.0
    %1447 = vmatpush.msra.mxu0 0.0
    %1448 = vmatpush.msra.mxu0 0.0
    %1449 = vmatpush.msra.mxu0 0.0
    %1450 = vmatpush.msra.mxu0 0.0
    %1451 = vmatpush.msra.mxu0 0.0
    %1452 = vmatpush.msra.mxu0 0.0
    %1453 = vmatpush.msra.mxu0 0.0
    %1454 = vmatpush.msra.mxu0 0.0
    %1455 = vmatpush.msra.mxu0 0.0
    %v1456 = vand.u32 %v1314, 4294901760
    %v1457 = vsub.f32 %v1314, %v1456
    %v1458 = vand.u32 %v1457, 4294901760
    %1459 = vmatpush.msra.mxu0 %v1458
    %v1460 = vand.u32 %v1311, 4294901760
    %v1461 = vsub.f32 %v1311, %v1460
    %v1462 = vand.u32 %v1461, 4294901760
    %1463 = vmatpush.msra.mxu0 %v1462
    %v1464 = vand.u32 %v1308, 4294901760
    %v1465 = vsub.f32 %v1308, %v1464
    %v1466 = vand.u32 %v1465, 4294901760
    %1467 = vmatpush.msra.mxu0 %v1466
    %v1468 = vand.u32 %v1305, 4294901760
    %v1469 = vsub.f32 %v1305, %v1468
    %v1470 = vand.u32 %v1469, 4294901760
    %1471 = vmatpush.msra.mxu0 %v1470
    %v1472 = vand.u32 %v100, 4294901760
    %1473 = vmatmul.f32.gmra.mxu0 %v1472
    %v1474 = vpop.f32.mrf.mxu0
    %v1475 = vadd.f32 %v1442, %v1474
    %1476 = vdwg.mxu0
    %1477 = vmatpush.msra.mxu0 0.0
    %1478 = vmatpush.msra.mxu0 0.0
    %1479 = vmatpush.msra.mxu0 0.0
    %1480 = vmatpush.msra.mxu0 0.0
    %1481 = vmatpush.msra.mxu0 0.0
    %1482 = vmatpush.msra.mxu0 0.0
    %1483 = vmatpush.msra.mxu0 0.0
    %1484 = vmatpush.msra.mxu0 0.0
    %1485 = vmatpush.msra.mxu0 0.0
    %1486 = vmatpush.msra.mxu0 0.0
    %1487 = vmatpush.msra.mxu0 0.0
    %1488 = vmatpush.msra.mxu0 0.0
    %v1489 = vand.u32 %v1314, 4294901760
    %1490 = vmatpush.msra.mxu0 %v1489
    %v1491 = vand.u32 %v1311, 4294901760
    %1492 = vmatpush.msra.mxu0 %v1491
    %v1493 = vand.u32 %v1308, 4294901760
    %1494 = vmatpush.msra.mxu0 %v1493
    %v1495 = vand.u32 %v1305, 4294901760
    %1496 = vmatpush.msra.mxu0 %v1495
    %v1497 = vand.u32 %v100, 4294901760
    %1498 = vmatmul.f32.gmra.mxu0 %v1497
    %v1499 = vpop.f32.mrf.mxu0
    %v1500 = vadd.f32 %v1475, %v1499
    %1501 = vdwg.mxu0
    %1502 = vmatpush.msra.mxu0 0.0
    %1503 = vmatpush.msra.mxu0 0.0
    %1504 = vmatpush.msra.mxu0 0.0
    %1505 = vmatpush.msra.mxu0 0.0
    %1506 = vmatpush.msra.mxu0 0.0
    %1507 = vmatpush.msra.mxu0 0.0
    %1508 = vmatpush.msra.mxu0 0.0
    %1509 = vmatpush.msra.mxu0 0.0
    %1510 = vmatpush.msra.mxu0 0.0
    %1511 = vmatpush.msra.mxu0 0.0
    %1512 = vmatpush.msra.mxu0 0.0
    %1513 = vmatpush.msra.mxu0 0.0
    %v1514 = vand.u32 %v1315, 4294901760
    %1515 = vmatpush.msra.mxu0 %v1514
    %v1516 = vand.u32 %v1312, 4294901760
    %1517 = vmatpush.msra.mxu0 %v1516
    %v1518 = vand.u32 %v1309, 4294901760
    %1519 = vmatpush.msra.mxu0 %v1518
    %v1520 = vand.u32 %v1306, 4294901760
    %1521 = vmatpush.msra.mxu0 %v1520
    %v1522 = vand.u32 %v100, 4294901760
    %v1523 = vsub.f32 %v100, %v1522
    %v1524 = vand.u32 %v1523, 4294901760
    %v1525 = vsub.f32 %v1523, %v1524
    %v1526 = vand.u32 %v1525, 4294901760
    %1527 = vmatmul.f32.gmra.mxu0 %v1526
    %v1528 = vpop.f32.mrf.mxu0
    %v1529 = vadd.f32 %v97, %v1528
    %1530 = vdwg.mxu0
    %1531 = vmatpush.msra.mxu0 0.0
    %1532 = vmatpush.msra.mxu0 0.0
    %1533 = vmatpush.msra.mxu0 0.0
    %1534 = vmatpush.msra.mxu0 0.0
    %1535 = vmatpush.msra.mxu0 0.0
    %1536 = vmatpush.msra.mxu0 0.0
    %1537 = vmatpush.msra.mxu0 0.0
    %1538 = vmatpush.msra.mxu0 0.0
    %1539 = vmatpush.msra.mxu0 0.0
    %1540 = vmatpush.msra.mxu0 0.0
    %1541 = vmatpush.msra.mxu0 0.0
    %1542 = vmatpush.msra.mxu0 0.0
    %v1543 = vand.u32 %v1315, 4294901760
    %v1544 = vsub.f32 %v1315, %v1543
    %v1545 = vand.u32 %v1544, 4294901760
    %v1546 = vsub.f32 %v1544, %v1545
    %v1547 = vand.u32 %v1546, 4294901760
    %1548 = vmatpush.msra.mxu0 %v1547
    %v1549 = vand.u32 %v1312, 4294901760
    %v1550 = vsub.f32 %v1312, %v1549
    %v1551 = vand.u32 %v1550, 4294901760
    %v1552 = vsub.f32 %v1550, %v1551
    %v1553 = vand.u32 %v1552, 4294901760
    %1554 = vmatpush.msra.mxu0 %v1553
    %v1555 = vand.u32 %v1309, 4294901760
    %v1556 = vsub.f32 %v1309, %v1555
    %v1557 = vand.u32 %v1556, 4294901760
    %v1558 = vsub.f32 %v1556, %v1557
    %v1559 = vand.u32 %v1558, 4294901760
    %1560 = vmatpush.msra.mxu0 %v1559
    %v1561 = vand.u32 %v1306, 4294901760
    %v1562 = vsub.f32 %v1306, %v1561
    %v1563 = vand.u32 %v1562, 4294901760
    %v1564 = vsub.f32 %v1562, %v1563
    %v1565 = vand.u32 %v1564, 4294901760
    %1566 = vmatpush.msra.mxu0 %v1565
    %v1567 = vand.u32 %v100, 4294901760
    %1568 = vmatmul.f32.gmra.mxu0 %v1567
    %v1569 = vpop.f32.mrf.mxu0
    %v1570 = vadd.f32 %v1529, %v1569
    %1571 = vdwg.mxu0
    %1572 = vmatpush.msra.mxu0 0.0
    %1573 = vmatpush.msra.mxu0 0.0
    %1574 = vmatpush.msra.mxu0 0.0
    %1575 = vmatpush.msra.mxu0 0.0
    %1576 = vmatpush.msra.mxu0 0.0
    %1577 = vmatpush.msra.mxu0 0.0
    %1578 = vmatpush.msra.mxu0 0.0
    %1579 = vmatpush.msra.mxu0 0.0
    %1580 = vmatpush.msra.mxu0 0.0
    %1581 = vmatpush.msra.mxu0 0.0
    %1582 = vmatpush.msra.mxu0 0.0
    %1583 = vmatpush.msra.mxu0 0.0
    %v1584 = vand.u32 %v1315, 4294901760
    %v1585 = vsub.f32 %v1315, %v1584
    %1586 = vmatpush.msra.mxu0 %v1585
    %v1587 = vand.u32 %v1312, 4294901760
    %v1588 = vsub.f32 %v1312, %v1587
    %1589 = vmatpush.msra.mxu0 %v1588
    %v1590 = vand.u32 %v1309, 4294901760
    %v1591 = vsub.f32 %v1309, %v1590
    %1592 = vmatpush.msra.mxu0 %v1591
    %v1593 = vand.u32 %v1306, 4294901760
    %v1594 = vsub.f32 %v1306, %v1593
    %1595 = vmatpush.msra.mxu0 %v1594
    %v1596 = vand.u32 %v100, 4294901760
    %v1597 = vsub.f32 %v100, %v1596
    %1598 = vmatmul.f32.gmra.mxu0 %v1597
    %v1599 = vpop.f32.mrf.mxu0
    %v1600 = vadd.f32 %v1570, %v1599
    %1601 = vdwg.mxu0
    %1602 = vmatpush.msra.mxu0 0.0
    %1603 = vmatpush.msra.mxu0 0.0
    %1604 = vmatpush.msra.mxu0 0.0
    %1605 = vmatpush.msra.mxu0 0.0
    %1606 = vmatpush.msra.mxu0 0.0
    %1607 = vmatpush.msra.mxu0 0.0
    %1608 = vmatpush.msra.mxu0 0.0
    %1609 = vmatpush.msra.mxu0 0.0
    %1610 = vmatpush.msra.mxu0 0.0
    %1611 = vmatpush.msra.mxu0 0.0
    %1612 = vmatpush.msra.mxu0 0.0
    %1613 = vmatpush.msra.mxu0 0.0
    %v1614 = vand.u32 %v1315, 4294901760
    %1615 = vmatpush.msra.mxu0 %v1614
    %v1616 = vand.u32 %v1312, 4294901760
    %1617 = vmatpush.msra.mxu0 %v1616
    %v1618 = vand.u32 %v1309, 4294901760
    %1619 = vmatpush.msra.mxu0 %v1618
    %v1620 = vand.u32 %v1306, 4294901760
    %1621 = vmatpush.msra.mxu0 %v1620
    %v1622 = vand.u32 %v100, 4294901760
    %v1623 = vsub.f32 %v100, %v1622
    %v1624 = vand.u32 %v1623, 4294901760
    %1625 = vmatmul.f32.gmra.mxu0 %v1624
    %v1626 = vpop.f32.mrf.mxu0
    %v1627 = vadd.f32 %v1600, %v1626
    %1628 = vdwg.mxu0
    %1629 = vmatpush.msra.mxu0 0.0
    %1630 = vmatpush.msra.mxu0 0.0
    %1631 = vmatpush.msra.mxu0 0.0
    %1632 = vmatpush.msra.mxu0 0.0
    %1633 = vmatpush.msra.mxu0 0.0
    %1634 = vmatpush.msra.mxu0 0.0
    %1635 = vmatpush.msra.mxu0 0.0
    %1636 = vmatpush.msra.mxu0 0.0
    %1637 = vmatpush.msra.mxu0 0.0
    %1638 = vmatpush.msra.mxu0 0.0
    %1639 = vmatpush.msra.mxu0 0.0
    %1640 = vmatpush.msra.mxu0 0.0
    %v1641 = vand.u32 %v1315, 4294901760
    %v1642 = vsub.f32 %v1315, %v1641
    %v1643 = vand.u32 %v1642, 4294901760
    %1644 = vmatpush.msra.mxu0 %v1643
    %v1645 = vand.u32 %v1312, 4294901760
    %v1646 = vsub.f32 %v1312, %v1645
    %v1647 = vand.u32 %v1646, 4294901760
    %1648 = vmatpush.msra.mxu0 %v1647
    %v1649 = vand.u32 %v1309, 4294901760
    %v1650 = vsub.f32 %v1309, %v1649
    %v1651 = vand.u32 %v1650, 4294901760
    %1652 = vmatpush.msra.mxu0 %v1651
    %v1653 = vand.u32 %v1306, 4294901760
    %v1654 = vsub.f32 %v1306, %v1653
    %v1655 = vand.u32 %v1654, 4294901760
    %1656 = vmatpush.msra.mxu0 %v1655
    %v1657 = vand.u32 %v100, 4294901760
    %1658 = vmatmul.f32.gmra.mxu0 %v1657
    %v1659 = vpop.f32.mrf.mxu0
    %v1660 = vadd.f32 %v1627, %v1659
    %1661 = vdwg.mxu0
    %1662 = vmatpush.msra.mxu0 0.0
    %1663 = vmatpush.msra.mxu0 0.0
    %1664 = vmatpush.msra.mxu0 0.0
    %1665 = vmatpush.msra.mxu0 0.0
    %1666 = vmatpush.msra.mxu0 0.0
    %1667 = vmatpush.msra.mxu0 0.0
    %1668 = vmatpush.msra.mxu0 0.0
    %1669 = vmatpush.msra.mxu0 0.0
    %1670 = vmatpush.msra.mxu0 0.0
    %1671 = vmatpush.msra.mxu0 0.0
    %1672 = vmatpush.msra.mxu0 0.0
    %1673 = vmatpush.msra.mxu0 0.0
    %v1674 = vand.u32 %v1315, 4294901760
    %1675 = vmatpush.msra.mxu0 %v1674
    %v1676 = vand.u32 %v1312, 4294901760
    %1677 = vmatpush.msra.mxu0 %v1676
    %v1678 = vand.u32 %v1309, 4294901760
    %1679 = vmatpush.msra.mxu0 %v1678
    %v1680 = vand.u32 %v1306, 4294901760
    %1681 = vmatpush.msra.mxu0 %v1680
    %v1682 = vand.u32 %v100, 4294901760
    %1683 = vmatmul.f32.gmra.mxu0 %v1682
    %v1684 = vpop.f32.mrf.mxu0
    %v1685 = vadd.f32 %v1660, %v1684
    %1686 = vdwg.mxu0
    %1687 = vmatpush.msra.mxu0 0.0
    %1688 = vmatpush.msra.mxu0 0.0
    %1689 = vmatpush.msra.mxu0 0.0
    %1690 = vmatpush.msra.mxu0 0.0
    %1691 = vmatpush.msra.mxu0 0.0
    %1692 = vmatpush.msra.mxu0 0.0
    %1693 = vmatpush.msra.mxu0 0.0
    %1694 = vmatpush.msra.mxu0 0.0
    %1695 = vmatpush.msra.mxu0 0.0
    %1696 = vmatpush.msra.mxu0 0.0
    %1697 = vmatpush.msra.mxu0 0.0
    %1698 = vmatpush.msra.mxu0 0.0
    %v1699 = vand.u32 %v1316, 4294901760
    %1700 = vmatpush.msra.mxu0 %v1699
    %v1701 = vand.u32 %v1313, 4294901760
    %1702 = vmatpush.msra.mxu0 %v1701
    %v1703 = vand.u32 %v1310, 4294901760
    %1704 = vmatpush.msra.mxu0 %v1703
    %v1705 = vand.u32 %v1307, 4294901760
    %1706 = vmatpush.msra.mxu0 %v1705
    %v1707 = vand.u32 %v100, 4294901760
    %v1708 = vsub.f32 %v100, %v1707
    %v1709 = vand.u32 %v1708, 4294901760
    %v1710 = vsub.f32 %v1708, %v1709
    %v1711 = vand.u32 %v1710, 4294901760
    %1712 = vmatmul.f32.gmra.mxu0 %v1711
    %v1713 = vpop.f32.mrf.mxu0
    %v1714 = vadd.f32 %v97, %v1713
    %1715 = vdwg.mxu0
    %1716 = vmatpush.msra.mxu0 0.0
    %1717 = vmatpush.msra.mxu0 0.0
    %1718 = vmatpush.msra.mxu0 0.0
    %1719 = vmatpush.msra.mxu0 0.0
    %1720 = vmatpush.msra.mxu0 0.0
    %1721 = vmatpush.msra.mxu0 0.0
    %1722 = vmatpush.msra.mxu0 0.0
    %1723 = vmatpush.msra.mxu0 0.0
    %1724 = vmatpush.msra.mxu0 0.0
    %1725 = vmatpush.msra.mxu0 0.0
    %1726 = vmatpush.msra.mxu0 0.0
    %1727 = vmatpush.msra.mxu0 0.0
    %v1728 = vand.u32 %v1316, 4294901760
    %v1729 = vsub.f32 %v1316, %v1728
    %v1730 = vand.u32 %v1729, 4294901760
    %v1731 = vsub.f32 %v1729, %v1730
    %v1732 = vand.u32 %v1731, 4294901760
    %1733 = vmatpush.msra.mxu0 %v1732
    %v1734 = vand.u32 %v1313, 4294901760
    %v1735 = vsub.f32 %v1313, %v1734
    %v1736 = vand.u32 %v1735, 4294901760
    %v1737 = vsub.f32 %v1735, %v1736
    %v1738 = vand.u32 %v1737, 4294901760
    %1739 = vmatpush.msra.mxu0 %v1738
    %v1740 = vand.u32 %v1310, 4294901760
    %v1741 = vsub.f32 %v1310, %v1740
    %v1742 = vand.u32 %v1741, 4294901760
    %v1743 = vsub.f32 %v1741, %v1742
    %v1744 = vand.u32 %v1743, 4294901760
    %1745 = vmatpush.msra.mxu0 %v1744
    %v1746 = vand.u32 %v1307, 4294901760
    %v1747 = vsub.f32 %v1307, %v1746
    %v1748 = vand.u32 %v1747, 4294901760
    %v1749 = vsub.f32 %v1747, %v1748
    %v1750 = vand.u32 %v1749, 4294901760
    %1751 = vmatpush.msra.mxu0 %v1750
    %v1752 = vand.u32 %v100, 4294901760
    %1753 = vmatmul.f32.gmra.mxu0 %v1752
    %v1754 = vpop.f32.mrf.mxu0
    %v1755 = vadd.f32 %v1714, %v1754
    %1756 = vdwg.mxu0
    %1757 = vmatpush.msra.mxu0 0.0
    %1758 = vmatpush.msra.mxu0 0.0
    %1759 = vmatpush.msra.mxu0 0.0
    %1760 = vmatpush.msra.mxu0 0.0
    %1761 = vmatpush.msra.mxu0 0.0
    %1762 = vmatpush.msra.mxu0 0.0
    %1763 = vmatpush.msra.mxu0 0.0
    %1764 = vmatpush.msra.mxu0 0.0
    %1765 = vmatpush.msra.mxu0 0.0
    %1766 = vmatpush.msra.mxu0 0.0
    %1767 = vmatpush.msra.mxu0 0.0
    %1768 = vmatpush.msra.mxu0 0.0
    %v1769 = vand.u32 %v1316, 4294901760
    %v1770 = vsub.f32 %v1316, %v1769
    %1771 = vmatpush.msra.mxu0 %v1770
    %v1772 = vand.u32 %v1313, 4294901760
    %v1773 = vsub.f32 %v1313, %v1772
    %1774 = vmatpush.msra.mxu0 %v1773
    %v1775 = vand.u32 %v1310, 4294901760
    %v1776 = vsub.f32 %v1310, %v1775
    %1777 = vmatpush.msra.mxu0 %v1776
    %v1778 = vand.u32 %v1307, 4294901760
    %v1779 = vsub.f32 %v1307, %v1778
    %1780 = vmatpush.msra.mxu0 %v1779
    %v1781 = vand.u32 %v100, 4294901760
    %v1782 = vsub.f32 %v100, %v1781
    %1783 = vmatmul.f32.gmra.mxu0 %v1782
    %v1784 = vpop.f32.mrf.mxu0
    %v1785 = vadd.f32 %v1755, %v1784
    %1786 = vdwg.mxu0
    %1787 = vmatpush.msra.mxu0 0.0
    %1788 = vmatpush.msra.mxu0 0.0
    %1789 = vmatpush.msra.mxu0 0.0
    %1790 = vmatpush.msra.mxu0 0.0
    %1791 = vmatpush.msra.mxu0 0.0
    %1792 = vmatpush.msra.mxu0 0.0
    %1793 = vmatpush.msra.mxu0 0.0
    %1794 = vmatpush.msra.mxu0 0.0
    %1795 = vmatpush.msra.mxu0 0.0
    %1796 = vmatpush.msra.mxu0 0.0
    %1797 = vmatpush.msra.mxu0 0.0
    %1798 = vmatpush.msra.mxu0 0.0
    %v1799 = vand.u32 %v1316, 4294901760
    %1800 = vmatpush.msra.mxu0 %v1799
    %v1801 = vand.u32 %v1313, 4294901760
    %1802 = vmatpush.msra.mxu0 %v1801
    %v1803 = vand.u32 %v1310, 4294901760
    %1804 = vmatpush.msra.mxu0 %v1803
    %v1805 = vand.u32 %v1307, 4294901760
    %1806 = vmatpush.msra.mxu0 %v1805
    %v1807 = vand.u32 %v100, 4294901760
    %v1808 = vsub.f32 %v100, %v1807
    %v1809 = vand.u32 %v1808, 4294901760
    %1810 = vmatmul.f32.gmra.mxu0 %v1809
    %v1811 = vpop.f32.mrf.mxu0
    %v1812 = vadd.f32 %v1785, %v1811
    %1813 = vdwg.mxu0
    %1814 = vmatpush.msra.mxu0 0.0
    %1815 = vmatpush.msra.mxu0 0.0
    %1816 = vmatpush.msra.mxu0 0.0
    %1817 = vmatpush.msra.mxu0 0.0
    %1818 = vmatpush.msra.mxu0 0.0
    %1819 = vmatpush.msra.mxu0 0.0
    %1820 = vmatpush.msra.mxu0 0.0
    %1821 = vmatpush.msra.mxu0 0.0
    %1822 = vmatpush.msra.mxu0 0.0
    %1823 = vmatpush.msra.mxu0 0.0
    %1824 = vmatpush.msra.mxu0 0.0
    %1825 = vmatpush.msra.mxu0 0.0
    %v1826 = vand.u32 %v1316, 4294901760
    %v1827 = vsub.f32 %v1316, %v1826
    %v1828 = vand.u32 %v1827, 4294901760
    %1829 = vmatpush.msra.mxu0 %v1828
    %v1830 = vand.u32 %v1313, 4294901760
    %v1831 = vsub.f32 %v1313, %v1830
    %v1832 = vand.u32 %v1831, 4294901760
    %1833 = vmatpush.msra.mxu0 %v1832
    %v1834 = vand.u32 %v1310, 4294901760
    %v1835 = vsub.f32 %v1310, %v1834
    %v1836 = vand.u32 %v1835, 4294901760
    %1837 = vmatpush.msra.mxu0 %v1836
    %v1838 = vand.u32 %v1307, 4294901760
    %v1839 = vsub.f32 %v1307, %v1838
    %v1840 = vand.u32 %v1839, 4294901760
    %1841 = vmatpush.msra.mxu0 %v1840
    %v1842 = vand.u32 %v100, 4294901760
    %1843 = vmatmul.f32.gmra.mxu0 %v1842
    %v1844 = vpop.f32.mrf.mxu0
    %v1845 = vadd.f32 %v1812, %v1844
    %1846 = vdwg.mxu0
    %1847 = vmatpush.msra.mxu0 0.0
    %1848 = vmatpush.msra.mxu0 0.0
    %1849 = vmatpush.msra.mxu0 0.0
    %1850 = vmatpush.msra.mxu0 0.0
    %1851 = vmatpush.msra.mxu0 0.0
    %1852 = vmatpush.msra.mxu0 0.0
    %1853 = vmatpush.msra.mxu0 0.0
    %1854 = vmatpush.msra.mxu0 0.0
    %1855 = vmatpush.msra.mxu0 0.0
    %1856 = vmatpush.msra.mxu0 0.0
    %1857 = vmatpush.msra.mxu0 0.0
    %1858 = vmatpush.msra.mxu0 0.0
    %v1859 = vand.u32 %v1316, 4294901760
    %1860 = vmatpush.msra.mxu0 %v1859
    %v1861 = vand.u32 %v1313, 4294901760
    %1862 = vmatpush.msra.mxu0 %v1861
    %v1863 = vand.u32 %v1310, 4294901760
    %1864 = vmatpush.msra.mxu0 %v1863
    %v1865 = vand.u32 %v1307, 4294901760
    %1866 = vmatpush.msra.mxu0 %v1865
    %v1867 = vand.u32 %v100, 4294901760
    %1868 = vmatmul.f32.gmra.mxu0 %v1867
    %v1869 = vpop.f32.mrf.mxu0
    %v1870 = vadd.f32 %v1845, %v1869
    %1871 = vdwg.mxu0
    %v1875 = vrot.slane %v1685, 7
    %v1876 = vrot.slane %v1870, 6
    %v1877 = vsel %vm662, %v1500, %v1875
    %v1878 = vsel %vm664, %v1877, %v1876
    %s1880 = scalar_lea.vmem [#allocation6], 2
    %1881 = vst.msk [vmem:[%s1880] ss:$4 sm:$0x7] %vm670, %v1878
    %1882 = vset.pattern.permute.xlu0 3
    %1883 = vperm.xlu0 %1882, %v35
    %v1884 = vpop.permute.xlu0 %1883
    %1886 = vset.pattern.permute.xlu0 3
    %1887 = vperm.xlu0 %1886, %v36
    %v1888 = vpop.permute.xlu0 %1887
    %1890 = vset.pattern.permute.xlu0 3
    %1891 = vperm.xlu0 %1890, %v37
    %v1892 = vpop.permute.xlu0 %1891
    %1894 = vset.pattern.permute.xlu0 3
    %1895 = vperm.xlu0 %1894, %v38
    %v1896 = vpop.permute.xlu0 %1895
    %v1898 = vadd.f32 %v1884, %v41
    %v1899 = vadd.f32 %v1884, %v42
    %v1900 = vadd.f32 %v1884, %v43
    %v1901 = vadd.f32 %v1888, %v44
    %v1902 = vadd.f32 %v1888, %v45
    %v1903 = vadd.f32 %v1888, %v46
    %v1904 = vadd.f32 %v1892, %v47
    %v1905 = vadd.f32 %v1892, %v48
    %v1906 = vadd.f32 %v1892, %v49
    %v1907 = vadd.f32 %v1896, %v50
    %v1908 = vadd.f32 %v1896, %v51
    %v1909 = vadd.f32 %v1896, %v52
    %v1910 = vtanh.pop %v1898
    %v1911 = vtanh.pop %v1899
    %v1912 = vtanh.pop %v1900
    %v1913 = vtanh.pop %v1901
    %v1914 = vtanh.pop %v1902
    %v1915 = vtanh.pop %v1903
    %v1916 = vtanh.pop %v1904
    %v1917 = vtanh.pop %v1905
    %v1918 = vtanh.pop %v1906
    %v1919 = vtanh.pop %v1907
    %v1920 = vtanh.pop %v1908
    %v1921 = vtanh.pop %v1909
    %1922 = vmatpush.msra.mxu0 0.0
    %1923 = vmatpush.msra.mxu0 0.0
    %1924 = vmatpush.msra.mxu0 0.0
    %1925 = vmatpush.msra.mxu0 0.0
    %1926 = vmatpush.msra.mxu0 0.0
    %1927 = vmatpush.msra.mxu0 0.0
    %1928 = vmatpush.msra.mxu0 0.0
    %1929 = vmatpush.msra.mxu0 0.0
    %1930 = vmatpush.msra.mxu0 0.0
    %1931 = vmatpush.msra.mxu0 0.0
    %1932 = vmatpush.msra.mxu0 0.0
    %1933 = vmatpush.msra.mxu0 0.0
    %v1934 = vand.u32 %v1919, 4294901760
    %1935 = vmatpush.msra.mxu0 %v1934
    %v1936 = vand.u32 %v1916, 4294901760
    %1937 = vmatpush.msra.mxu0 %v1936
    %v1938 = vand.u32 %v1913, 4294901760
    %1939 = vmatpush.msra.mxu0 %v1938
    %v1940 = vand.u32 %v1910, 4294901760
    %1941 = vmatpush.msra.mxu0 %v1940
    %v1942 = vand.u32 %v100, 4294901760
    %v1943 = vsub.f32 %v100, %v1942
    %v1944 = vand.u32 %v1943, 4294901760
    %v1945 = vsub.f32 %v1943, %v1944
    %v1946 = vand.u32 %v1945, 4294901760
    %1947 = vmatmul.f32.gmra.mxu0 %v1946
    %v1948 = vpop.f32.mrf.mxu0
    %v1949 = vadd.f32 %v97, %v1948
    %1950 = vdwg.mxu0
    %1951 = vmatpush.msra.mxu0 0.0
    %1952 = vmatpush.msra.mxu0 0.0
    %1953 = vmatpush.msra.mxu0 0.0
    %1954 = vmatpush.msra.mxu0 0.0
    %1955 = vmatpush.msra.mxu0 0.0
    %1956 = vmatpush.msra.mxu0 0.0
    %1957 = vmatpush.msra.mxu0 0.0
    %1958 = vmatpush.msra.mxu0 0.0
    %1959 = vmatpush.msra.mxu0 0.0
    %1960 = vmatpush.msra.mxu0 0.0
    %1961 = vmatpush.msra.mxu0 0.0
    %1962 = vmatpush.msra.mxu0 0.0
    %v1963 = vand.u32 %v1919, 4294901760
    %v1964 = vsub.f32 %v1919, %v1963
    %v1965 = vand.u32 %v1964, 4294901760
    %v1966 = vsub.f32 %v1964, %v1965
    %v1967 = vand.u32 %v1966, 4294901760
    %1968 = vmatpush.msra.mxu0 %v1967
    %v1969 = vand.u32 %v1916, 4294901760
    %v1970 = vsub.f32 %v1916, %v1969
    %v1971 = vand.u32 %v1970, 4294901760
    %v1972 = vsub.f32 %v1970, %v1971
    %v1973 = vand.u32 %v1972, 4294901760
    %1974 = vmatpush.msra.mxu0 %v1973
    %v1975 = vand.u32 %v1913, 4294901760
    %v1976 = vsub.f32 %v1913, %v1975
    %v1977 = vand.u32 %v1976, 4294901760
    %v1978 = vsub.f32 %v1976, %v1977
    %v1979 = vand.u32 %v1978, 4294901760
    %1980 = vmatpush.msra.mxu0 %v1979
    %v1981 = vand.u32 %v1910, 4294901760
    %v1982 = vsub.f32 %v1910, %v1981
    %v1983 = vand.u32 %v1982, 4294901760
    %v1984 = vsub.f32 %v1982, %v1983
    %v1985 = vand.u32 %v1984, 4294901760
    %1986 = vmatpush.msra.mxu0 %v1985
    %v1987 = vand.u32 %v100, 4294901760
    %1988 = vmatmul.f32.gmra.mxu0 %v1987
    %v1989 = vpop.f32.mrf.mxu0
    %v1990 = vadd.f32 %v1949, %v1989
    %1991 = vdwg.mxu0
    %1992 = vmatpush.msra.mxu0 0.0
    %1993 = vmatpush.msra.mxu0 0.0
    %1994 = vmatpush.msra.mxu0 0.0
    %1995 = vmatpush.msra.mxu0 0.0
    %1996 = vmatpush.msra.mxu0 0.0
    %1997 = vmatpush.msra.mxu0 0.0
    %1998 = vmatpush.msra.mxu0 0.0
    %1999 = vmatpush.msra.mxu0 0.0
    %2000 = vmatpush.msra.mxu0 0.0
    %2001 = vmatpush.msra.mxu0 0.0
    %2002 = vmatpush.msra.mxu0 0.0
    %2003 = vmatpush.msra.mxu0 0.0
    %v2004 = vand.u32 %v1919, 4294901760
    %v2005 = vsub.f32 %v1919, %v2004
    %2006 = vmatpush.msra.mxu0 %v2005
    %v2007 = vand.u32 %v1916, 4294901760
    %v2008 = vsub.f32 %v1916, %v2007
    %2009 = vmatpush.msra.mxu0 %v2008
    %v2010 = vand.u32 %v1913, 4294901760
    %v2011 = vsub.f32 %v1913, %v2010
    %2012 = vmatpush.msra.mxu0 %v2011
    %v2013 = vand.u32 %v1910, 4294901760
    %v2014 = vsub.f32 %v1910, %v2013
    %2015 = vmatpush.msra.mxu0 %v2014
    %v2016 = vand.u32 %v100, 4294901760
    %v2017 = vsub.f32 %v100, %v2016
    %2018 = vmatmul.f32.gmra.mxu0 %v2017
    %v2019 = vpop.f32.mrf.mxu0
    %v2020 = vadd.f32 %v1990, %v2019
    %2021 = vdwg.mxu0
    %2022 = vmatpush.msra.mxu0 0.0
    %2023 = vmatpush.msra.mxu0 0.0
    %2024 = vmatpush.msra.mxu0 0.0
    %2025 = vmatpush.msra.mxu0 0.0
    %2026 = vmatpush.msra.mxu0 0.0
    %2027 = vmatpush.msra.mxu0 0.0
    %2028 = vmatpush.msra.mxu0 0.0
    %2029 = vmatpush.msra.mxu0 0.0
    %2030 = vmatpush.msra.mxu0 0.0
    %2031 = vmatpush.msra.mxu0 0.0
    %2032 = vmatpush.msra.mxu0 0.0
    %2033 = vmatpush.msra.mxu0 0.0
    %v2034 = vand.u32 %v1919, 4294901760
    %2035 = vmatpush.msra.mxu0 %v2034
    %v2036 = vand.u32 %v1916, 4294901760
    %2037 = vmatpush.msra.mxu0 %v2036
    %v2038 = vand.u32 %v1913, 4294901760
    %2039 = vmatpush.msra.mxu0 %v2038
    %v2040 = vand.u32 %v1910, 4294901760
    %2041 = vmatpush.msra.mxu0 %v2040
    %v2042 = vand.u32 %v100, 4294901760
    %v2043 = vsub.f32 %v100, %v2042
    %v2044 = vand.u32 %v2043, 4294901760
    %2045 = vmatmul.f32.gmra.mxu0 %v2044
    %v2046 = vpop.f32.mrf.mxu0
    %v2047 = vadd.f32 %v2020, %v2046
    %2048 = vdwg.mxu0
    %2049 = vmatpush.msra.mxu0 0.0
    %2050 = vmatpush.msra.mxu0 0.0
    %2051 = vmatpush.msra.mxu0 0.0
    %2052 = vmatpush.msra.mxu0 0.0
    %2053 = vmatpush.msra.mxu0 0.0
    %2054 = vmatpush.msra.mxu0 0.0
    %2055 = vmatpush.msra.mxu0 0.0
    %2056 = vmatpush.msra.mxu0 0.0
    %2057 = vmatpush.msra.mxu0 0.0
    %2058 = vmatpush.msra.mxu0 0.0
    %2059 = vmatpush.msra.mxu0 0.0
    %2060 = vmatpush.msra.mxu0 0.0
    %v2061 = vand.u32 %v1919, 4294901760
    %v2062 = vsub.f32 %v1919, %v2061
    %v2063 = vand.u32 %v2062, 4294901760
    %2064 = vmatpush.msra.mxu0 %v2063
    %v2065 = vand.u32 %v1916, 4294901760
    %v2066 = vsub.f32 %v1916, %v2065
    %v2067 = vand.u32 %v2066, 4294901760
    %2068 = vmatpush.msra.mxu0 %v2067
    %v2069 = vand.u32 %v1913, 4294901760
    %v2070 = vsub.f32 %v1913, %v2069
    %v2071 = vand.u32 %v2070, 4294901760
    %2072 = vmatpush.msra.mxu0 %v2071
    %v2073 = vand.u32 %v1910, 4294901760
    %v2074 = vsub.f32 %v1910, %v2073
    %v2075 = vand.u32 %v2074, 4294901760
    %2076 = vmatpush.msra.mxu0 %v2075
    %v2077 = vand.u32 %v100, 4294901760
    %2078 = vmatmul.f32.gmra.mxu0 %v2077
    %v2079 = vpop.f32.mrf.mxu0
    %v2080 = vadd.f32 %v2047, %v2079
    %2081 = vdwg.mxu0
    %2082 = vmatpush.msra.mxu0 0.0
    %2083 = vmatpush.msra.mxu0 0.0
    %2084 = vmatpush.msra.mxu0 0.0
    %2085 = vmatpush.msra.mxu0 0.0
    %2086 = vmatpush.msra.mxu0 0.0
    %2087 = vmatpush.msra.mxu0 0.0
    %2088 = vmatpush.msra.mxu0 0.0
    %2089 = vmatpush.msra.mxu0 0.0
    %2090 = vmatpush.msra.mxu0 0.0
    %2091 = vmatpush.msra.mxu0 0.0
    %2092 = vmatpush.msra.mxu0 0.0
    %2093 = vmatpush.msra.mxu0 0.0
    %v2094 = vand.u32 %v1919, 4294901760
    %2095 = vmatpush.msra.mxu0 %v2094
    %v2096 = vand.u32 %v1916, 4294901760
    %2097 = vmatpush.msra.mxu0 %v2096
    %v2098 = vand.u32 %v1913, 4294901760
    %2099 = vmatpush.msra.mxu0 %v2098
    %v2100 = vand.u32 %v1910, 4294901760
    %2101 = vmatpush.msra.mxu0 %v2100
    %v2102 = vand.u32 %v100, 4294901760
    %2103 = vmatmul.f32.gmra.mxu0 %v2102
    %v2104 = vpop.f32.mrf.mxu0
    %v2105 = vadd.f32 %v2080, %v2104
    %2106 = vdwg.mxu0
    %2107 = vmatpush.msra.mxu0 0.0
    %2108 = vmatpush.msra.mxu0 0.0
    %2109 = vmatpush.msra.mxu0 0.0
    %2110 = vmatpush.msra.mxu0 0.0
    %2111 = vmatpush.msra.mxu0 0.0
    %2112 = vmatpush.msra.mxu0 0.0
    %2113 = vmatpush.msra.mxu0 0.0
    %2114 = vmatpush.msra.mxu0 0.0
    %2115 = vmatpush.msra.mxu0 0.0
    %2116 = vmatpush.msra.mxu0 0.0
    %2117 = vmatpush.msra.mxu0 0.0
    %2118 = vmatpush.msra.mxu0 0.0
    %v2119 = vand.u32 %v1920, 4294901760
    %2120 = vmatpush.msra.mxu0 %v2119
    %v2121 = vand.u32 %v1917, 4294901760
    %2122 = vmatpush.msra.mxu0 %v2121
    %v2123 = vand.u32 %v1914, 4294901760
    %2124 = vmatpush.msra.mxu0 %v2123
    %v2125 = vand.u32 %v1911, 4294901760
    %2126 = vmatpush.msra.mxu0 %v2125
    %v2127 = vand.u32 %v100, 4294901760
    %v2128 = vsub.f32 %v100, %v2127
    %v2129 = vand.u32 %v2128, 4294901760
    %v2130 = vsub.f32 %v2128, %v2129
    %v2131 = vand.u32 %v2130, 4294901760
    %2132 = vmatmul.f32.gmra.mxu0 %v2131
    %v2133 = vpop.f32.mrf.mxu0
    %v2134 = vadd.f32 %v97, %v2133
    %2135 = vdwg.mxu0
    %2136 = vmatpush.msra.mxu0 0.0
    %2137 = vmatpush.msra.mxu0 0.0
    %2138 = vmatpush.msra.mxu0 0.0
    %2139 = vmatpush.msra.mxu0 0.0
    %2140 = vmatpush.msra.mxu0 0.0
    %2141 = vmatpush.msra.mxu0 0.0
    %2142 = vmatpush.msra.mxu0 0.0
    %2143 = vmatpush.msra.mxu0 0.0
    %2144 = vmatpush.msra.mxu0 0.0
    %2145 = vmatpush.msra.mxu0 0.0
    %2146 = vmatpush.msra.mxu0 0.0
    %2147 = vmatpush.msra.mxu0 0.0
    %v2148 = vand.u32 %v1920, 4294901760
    %v2149 = vsub.f32 %v1920, %v2148
    %v2150 = vand.u32 %v2149, 4294901760
    %v2151 = vsub.f32 %v2149, %v2150
    %v2152 = vand.u32 %v2151, 4294901760
    %2153 = vmatpush.msra.mxu0 %v2152
    %v2154 = vand.u32 %v1917, 4294901760
    %v2155 = vsub.f32 %v1917, %v2154
    %v2156 = vand.u32 %v2155, 4294901760
    %v2157 = vsub.f32 %v2155, %v2156
    %v2158 = vand.u32 %v2157, 4294901760
    %2159 = vmatpush.msra.mxu0 %v2158
    %v2160 = vand.u32 %v1914, 4294901760
    %v2161 = vsub.f32 %v1914, %v2160
    %v2162 = vand.u32 %v2161, 4294901760
    %v2163 = vsub.f32 %v2161, %v2162
    %v2164 = vand.u32 %v2163, 4294901760
    %2165 = vmatpush.msra.mxu0 %v2164
    %v2166 = vand.u32 %v1911, 4294901760
    %v2167 = vsub.f32 %v1911, %v2166
    %v2168 = vand.u32 %v2167, 4294901760
    %v2169 = vsub.f32 %v2167, %v2168
    %v2170 = vand.u32 %v2169, 4294901760
    %2171 = vmatpush.msra.mxu0 %v2170
    %v2172 = vand.u32 %v100, 4294901760
    %2173 = vmatmul.f32.gmra.mxu0 %v2172
    %v2174 = vpop.f32.mrf.mxu0
    %v2175 = vadd.f32 %v2134, %v2174
    %2176 = vdwg.mxu0
    %2177 = vmatpush.msra.mxu0 0.0
    %2178 = vmatpush.msra.mxu0 0.0
    %2179 = vmatpush.msra.mxu0 0.0
    %2180 = vmatpush.msra.mxu0 0.0
    %2181 = vmatpush.msra.mxu0 0.0
    %2182 = vmatpush.msra.mxu0 0.0
    %2183 = vmatpush.msra.mxu0 0.0
    %2184 = vmatpush.msra.mxu0 0.0
    %2185 = vmatpush.msra.mxu0 0.0
    %2186 = vmatpush.msra.mxu0 0.0
    %2187 = vmatpush.msra.mxu0 0.0
    %2188 = vmatpush.msra.mxu0 0.0
    %v2189 = vand.u32 %v1920, 4294901760
    %v2190 = vsub.f32 %v1920, %v2189
    %2191 = vmatpush.msra.mxu0 %v2190
    %v2192 = vand.u32 %v1917, 4294901760
    %v2193 = vsub.f32 %v1917, %v2192
    %2194 = vmatpush.msra.mxu0 %v2193
    %v2195 = vand.u32 %v1914, 4294901760
    %v2196 = vsub.f32 %v1914, %v2195
    %2197 = vmatpush.msra.mxu0 %v2196
    %v2198 = vand.u32 %v1911, 4294901760
    %v2199 = vsub.f32 %v1911, %v2198
    %2200 = vmatpush.msra.mxu0 %v2199
    %v2201 = vand.u32 %v100, 4294901760
    %v2202 = vsub.f32 %v100, %v2201
    %2203 = vmatmul.f32.gmra.mxu0 %v2202
    %v2204 = vpop.f32.mrf.mxu0
    %v2205 = vadd.f32 %v2175, %v2204
    %2206 = vdwg.mxu0
    %2207 = vmatpush.msra.mxu0 0.0
    %2208 = vmatpush.msra.mxu0 0.0
    %2209 = vmatpush.msra.mxu0 0.0
    %2210 = vmatpush.msra.mxu0 0.0
    %2211 = vmatpush.msra.mxu0 0.0
    %2212 = vmatpush.msra.mxu0 0.0
    %2213 = vmatpush.msra.mxu0 0.0
    %2214 = vmatpush.msra.mxu0 0.0
    %2215 = vmatpush.msra.mxu0 0.0
    %2216 = vmatpush.msra.mxu0 0.0
    %2217 = vmatpush.msra.mxu0 0.0
    %2218 = vmatpush.msra.mxu0 0.0
    %v2219 = vand.u32 %v1920, 4294901760
    %2220 = vmatpush.msra.mxu0 %v2219
    %v2221 = vand.u32 %v1917, 4294901760
    %2222 = vmatpush.msra.mxu0 %v2221
    %v2223 = vand.u32 %v1914, 4294901760
    %2224 = vmatpush.msra.mxu0 %v2223
    %v2225 = vand.u32 %v1911, 4294901760
    %2226 = vmatpush.msra.mxu0 %v2225
    %v2227 = vand.u32 %v100, 4294901760
    %v2228 = vsub.f32 %v100, %v2227
    %v2229 = vand.u32 %v2228, 4294901760
    %2230 = vmatmul.f32.gmra.mxu0 %v2229
    %v2231 = vpop.f32.mrf.mxu0
    %v2232 = vadd.f32 %v2205, %v2231
    %2233 = vdwg.mxu0
    %2234 = vmatpush.msra.mxu0 0.0
    %2235 = vmatpush.msra.mxu0 0.0
    %2236 = vmatpush.msra.mxu0 0.0
    %2237 = vmatpush.msra.mxu0 0.0
    %2238 = vmatpush.msra.mxu0 0.0
    %2239 = vmatpush.msra.mxu0 0.0
    %2240 = vmatpush.msra.mxu0 0.0
    %2241 = vmatpush.msra.mxu0 0.0
    %2242 = vmatpush.msra.mxu0 0.0
    %2243 = vmatpush.msra.mxu0 0.0
    %2244 = vmatpush.msra.mxu0 0.0
    %2245 = vmatpush.msra.mxu0 0.0
    %v2246 = vand.u32 %v1920, 4294901760
    %v2247 = vsub.f32 %v1920, %v2246
    %v2248 = vand.u32 %v2247, 4294901760
    %2249 = vmatpush.msra.mxu0 %v2248
    %v2250 = vand.u32 %v1917, 4294901760
    %v2251 = vsub.f32 %v1917, %v2250
    %v2252 = vand.u32 %v2251, 4294901760
    %2253 = vmatpush.msra.mxu0 %v2252
    %v2254 = vand.u32 %v1914, 4294901760
    %v2255 = vsub.f32 %v1914, %v2254
    %v2256 = vand.u32 %v2255, 4294901760
    %2257 = vmatpush.msra.mxu0 %v2256
    %v2258 = vand.u32 %v1911, 4294901760
    %v2259 = vsub.f32 %v1911, %v2258
    %v2260 = vand.u32 %v2259, 4294901760
    %2261 = vmatpush.msra.mxu0 %v2260
    %v2262 = vand.u32 %v100, 4294901760
    %2263 = vmatmul.f32.gmra.mxu0 %v2262
    %v2264 = vpop.f32.mrf.mxu0
    %v2265 = vadd.f32 %v2232, %v2264
    %2266 = vdwg.mxu0
    %2267 = vmatpush.msra.mxu0 0.0
    %2268 = vmatpush.msra.mxu0 0.0
    %2269 = vmatpush.msra.mxu0 0.0
    %2270 = vmatpush.msra.mxu0 0.0
    %2271 = vmatpush.msra.mxu0 0.0
    %2272 = vmatpush.msra.mxu0 0.0
    %2273 = vmatpush.msra.mxu0 0.0
    %2274 = vmatpush.msra.mxu0 0.0
    %2275 = vmatpush.msra.mxu0 0.0
    %2276 = vmatpush.msra.mxu0 0.0
    %2277 = vmatpush.msra.mxu0 0.0
    %2278 = vmatpush.msra.mxu0 0.0
    %v2279 = vand.u32 %v1920, 4294901760
    %2280 = vmatpush.msra.mxu0 %v2279
    %v2281 = vand.u32 %v1917, 4294901760
    %2282 = vmatpush.msra.mxu0 %v2281
    %v2283 = vand.u32 %v1914, 4294901760
    %2284 = vmatpush.msra.mxu0 %v2283
    %v2285 = vand.u32 %v1911, 4294901760
    %2286 = vmatpush.msra.mxu0 %v2285
    %v2287 = vand.u32 %v100, 4294901760
    %2288 = vmatmul.f32.gmra.mxu0 %v2287
    %v2289 = vpop.f32.mrf.mxu0
    %v2290 = vadd.f32 %v2265, %v2289
    %2291 = vdwg.mxu0
    %2292 = vmatpush.msra.mxu0 0.0
    %2293 = vmatpush.msra.mxu0 0.0
    %2294 = vmatpush.msra.mxu0 0.0
    %2295 = vmatpush.msra.mxu0 0.0
    %2296 = vmatpush.msra.mxu0 0.0
    %2297 = vmatpush.msra.mxu0 0.0
    %2298 = vmatpush.msra.mxu0 0.0
    %2299 = vmatpush.msra.mxu0 0.0
    %2300 = vmatpush.msra.mxu0 0.0
    %2301 = vmatpush.msra.mxu0 0.0
    %2302 = vmatpush.msra.mxu0 0.0
    %2303 = vmatpush.msra.mxu0 0.0
    %v2304 = vand.u32 %v1921, 4294901760
    %2305 = vmatpush.msra.mxu0 %v2304
    %v2306 = vand.u32 %v1918, 4294901760
    %2307 = vmatpush.msra.mxu0 %v2306
    %v2308 = vand.u32 %v1915, 4294901760
    %2309 = vmatpush.msra.mxu0 %v2308
    %v2310 = vand.u32 %v1912, 4294901760
    %2311 = vmatpush.msra.mxu0 %v2310
    %v2312 = vand.u32 %v100, 4294901760
    %v2313 = vsub.f32 %v100, %v2312
    %v2314 = vand.u32 %v2313, 4294901760
    %v2315 = vsub.f32 %v2313, %v2314
    %v2316 = vand.u32 %v2315, 4294901760
    %2317 = vmatmul.f32.gmra.mxu0 %v2316
    %v2318 = vpop.f32.mrf.mxu0
    %v2319 = vadd.f32 %v97, %v2318
    %2320 = vdwg.mxu0
    %2321 = vmatpush.msra.mxu0 0.0
    %2322 = vmatpush.msra.mxu0 0.0
    %2323 = vmatpush.msra.mxu0 0.0
    %2324 = vmatpush.msra.mxu0 0.0
    %2325 = vmatpush.msra.mxu0 0.0
    %2326 = vmatpush.msra.mxu0 0.0
    %2327 = vmatpush.msra.mxu0 0.0
    %2328 = vmatpush.msra.mxu0 0.0
    %2329 = vmatpush.msra.mxu0 0.0
    %2330 = vmatpush.msra.mxu0 0.0
    %2331 = vmatpush.msra.mxu0 0.0
    %2332 = vmatpush.msra.mxu0 0.0
    %v2333 = vand.u32 %v1921, 4294901760
    %v2334 = vsub.f32 %v1921, %v2333
    %v2335 = vand.u32 %v2334, 4294901760
    %v2336 = vsub.f32 %v2334, %v2335
    %v2337 = vand.u32 %v2336, 4294901760
    %2338 = vmatpush.msra.mxu0 %v2337
    %v2339 = vand.u32 %v1918, 4294901760
    %v2340 = vsub.f32 %v1918, %v2339
    %v2341 = vand.u32 %v2340, 4294901760
    %v2342 = vsub.f32 %v2340, %v2341
    %v2343 = vand.u32 %v2342, 4294901760
    %2344 = vmatpush.msra.mxu0 %v2343
    %v2345 = vand.u32 %v1915, 4294901760
    %v2346 = vsub.f32 %v1915, %v2345
    %v2347 = vand.u32 %v2346, 4294901760
    %v2348 = vsub.f32 %v2346, %v2347
    %v2349 = vand.u32 %v2348, 4294901760
    %2350 = vmatpush.msra.mxu0 %v2349
    %v2351 = vand.u32 %v1912, 4294901760
    %v2352 = vsub.f32 %v1912, %v2351
    %v2353 = vand.u32 %v2352, 4294901760
    %v2354 = vsub.f32 %v2352, %v2353
    %v2355 = vand.u32 %v2354, 4294901760
    %2356 = vmatpush.msra.mxu0 %v2355
    %v2357 = vand.u32 %v100, 4294901760
    %2358 = vmatmul.f32.gmra.mxu0 %v2357
    %v2359 = vpop.f32.mrf.mxu0
    %v2360 = vadd.f32 %v2319, %v2359
    %2361 = vdwg.mxu0
    %2362 = vmatpush.msra.mxu0 0.0
    %2363 = vmatpush.msra.mxu0 0.0
    %2364 = vmatpush.msra.mxu0 0.0
    %2365 = vmatpush.msra.mxu0 0.0
    %2366 = vmatpush.msra.mxu0 0.0
    %2367 = vmatpush.msra.mxu0 0.0
    %2368 = vmatpush.msra.mxu0 0.0
    %2369 = vmatpush.msra.mxu0 0.0
    %2370 = vmatpush.msra.mxu0 0.0
    %2371 = vmatpush.msra.mxu0 0.0
    %2372 = vmatpush.msra.mxu0 0.0
    %2373 = vmatpush.msra.mxu0 0.0
    %v2374 = vand.u32 %v1921, 4294901760
    %v2375 = vsub.f32 %v1921, %v2374
    %2376 = vmatpush.msra.mxu0 %v2375
    %v2377 = vand.u32 %v1918, 4294901760
    %v2378 = vsub.f32 %v1918, %v2377
    %2379 = vmatpush.msra.mxu0 %v2378
    %v2380 = vand.u32 %v1915, 4294901760
    %v2381 = vsub.f32 %v1915, %v2380
    %2382 = vmatpush.msra.mxu0 %v2381
    %v2383 = vand.u32 %v1912, 4294901760
    %v2384 = vsub.f32 %v1912, %v2383
    %2385 = vmatpush.msra.mxu0 %v2384
    %v2386 = vand.u32 %v100, 4294901760
    %v2387 = vsub.f32 %v100, %v2386
    %2388 = vmatmul.f32.gmra.mxu0 %v2387
    %v2389 = vpop.f32.mrf.mxu0
    %v2390 = vadd.f32 %v2360, %v2389
    %2391 = vdwg.mxu0
    %2392 = vmatpush.msra.mxu0 0.0
    %2393 = vmatpush.msra.mxu0 0.0
    %2394 = vmatpush.msra.mxu0 0.0
    %2395 = vmatpush.msra.mxu0 0.0
    %2396 = vmatpush.msra.mxu0 0.0
    %2397 = vmatpush.msra.mxu0 0.0
    %2398 = vmatpush.msra.mxu0 0.0
    %2399 = vmatpush.msra.mxu0 0.0
    %2400 = vmatpush.msra.mxu0 0.0
    %2401 = vmatpush.msra.mxu0 0.0
    %2402 = vmatpush.msra.mxu0 0.0
    %2403 = vmatpush.msra.mxu0 0.0
    %v2404 = vand.u32 %v1921, 4294901760
    %2405 = vmatpush.msra.mxu0 %v2404
    %v2406 = vand.u32 %v1918, 4294901760
    %2407 = vmatpush.msra.mxu0 %v2406
    %v2408 = vand.u32 %v1915, 4294901760
    %2409 = vmatpush.msra.mxu0 %v2408
    %v2410 = vand.u32 %v1912, 4294901760
    %2411 = vmatpush.msra.mxu0 %v2410
    %v2412 = vand.u32 %v100, 4294901760
    %v2413 = vsub.f32 %v100, %v2412
    %v2414 = vand.u32 %v2413, 4294901760
    %2415 = vmatmul.f32.gmra.mxu0 %v2414
    %v2416 = vpop.f32.mrf.mxu0
    %v2417 = vadd.f32 %v2390, %v2416
    %2418 = vdwg.mxu0
    %2419 = vmatpush.msra.mxu0 0.0
    %2420 = vmatpush.msra.mxu0 0.0
    %2421 = vmatpush.msra.mxu0 0.0
    %2422 = vmatpush.msra.mxu0 0.0
    %2423 = vmatpush.msra.mxu0 0.0
    %2424 = vmatpush.msra.mxu0 0.0
    %2425 = vmatpush.msra.mxu0 0.0
    %2426 = vmatpush.msra.mxu0 0.0
    %2427 = vmatpush.msra.mxu0 0.0
    %2428 = vmatpush.msra.mxu0 0.0
    %2429 = vmatpush.msra.mxu0 0.0
    %2430 = vmatpush.msra.mxu0 0.0
    %v2431 = vand.u32 %v1921, 4294901760
    %v2432 = vsub.f32 %v1921, %v2431
    %v2433 = vand.u32 %v2432, 4294901760
    %2434 = vmatpush.msra.mxu0 %v2433
    %v2435 = vand.u32 %v1918, 4294901760
    %v2436 = vsub.f32 %v1918, %v2435
    %v2437 = vand.u32 %v2436, 4294901760
    %2438 = vmatpush.msra.mxu0 %v2437
    %v2439 = vand.u32 %v1915, 4294901760
    %v2440 = vsub.f32 %v1915, %v2439
    %v2441 = vand.u32 %v2440, 4294901760
    %2442 = vmatpush.msra.mxu0 %v2441
    %v2443 = vand.u32 %v1912, 4294901760
    %v2444 = vsub.f32 %v1912, %v2443
    %v2445 = vand.u32 %v2444, 4294901760
    %2446 = vmatpush.msra.mxu0 %v2445
    %v2447 = vand.u32 %v100, 4294901760
    %2448 = vmatmul.f32.gmra.mxu0 %v2447
    %v2449 = vpop.f32.mrf.mxu0
    %v2450 = vadd.f32 %v2417, %v2449
    %2451 = vdwg.mxu0
    %2452 = vmatpush.msra.mxu0 0.0
    %2453 = vmatpush.msra.mxu0 0.0
    %2454 = vmatpush.msra.mxu0 0.0
    %2455 = vmatpush.msra.mxu0 0.0
    %2456 = vmatpush.msra.mxu0 0.0
    %2457 = vmatpush.msra.mxu0 0.0
    %2458 = vmatpush.msra.mxu0 0.0
    %2459 = vmatpush.msra.mxu0 0.0
    %2460 = vmatpush.msra.mxu0 0.0
    %2461 = vmatpush.msra.mxu0 0.0
    %2462 = vmatpush.msra.mxu0 0.0
    %2463 = vmatpush.msra.mxu0 0.0
    %v2464 = vand.u32 %v1921, 4294901760
    %2465 = vmatpush.msra.mxu0 %v2464
    %v2466 = vand.u32 %v1918, 4294901760
    %2467 = vmatpush.msra.mxu0 %v2466
    %v2468 = vand.u32 %v1915, 4294901760
    %2469 = vmatpush.msra.mxu0 %v2468
    %v2470 = vand.u32 %v1912, 4294901760
    %2471 = vmatpush.msra.mxu0 %v2470
    %v2472 = vand.u32 %v100, 4294901760
    %2473 = vmatmul.f32.gmra.mxu0 %v2472
    %v2474 = vpop.f32.mrf.mxu0
    %v2475 = vadd.f32 %v2450, %v2474
    %2476 = vdwg.mxu0
    %v2480 = vrot.slane %v2290, 7
    %v2481 = vrot.slane %v2475, 6
    %v2482 = vsel %vm662, %v2105, %v2480
    %v2483 = vsel %vm664, %v2482, %v2481
    %s2485 = scalar_lea.vmem [#allocation6], 3
    %2486 = vst.msk [vmem:[%s2485] ss:$4 sm:$0x7] %vm670, %v2483
    // Predicated region
    $region22: #{tpu_custom_call.1} parent=1 // pred_check
      _
    $region23: #{tpu_custom_call.1} parent=1 // pred_check_branch
      %2488 = sbr.rel (0) target = $region25
    $region24: #{tpu_custom_call.1} parent=1 // pred_region
      %2490 = vsyncadd [#allocation5], 0
      %s2492 = sshll.u32 [#allocation6], 4
      %s2493 = int_to_ptr.vmem [resolvable:$true] %s2492
      %s2494 = sshll.u32 %s4, 4
      %s2495 = int_to_ptr.hbm [resolvable:$true] %s2494
      %2497 = dma.vmem_to_hbm [thread:$0]  %s2493, 192, %s2495, [#allocation5]
    $region25: #{tpu_custom_call.1} parent=1 // pred_fallthru
      _
    // Predicated region
    $region26: #{tpu_custom_call.1} parent=1 // pred_check
      _
    $region27: #{tpu_custom_call.1} parent=1 // pred_check_branch
      %2499 = sbr.rel (0) target = $region29
    $region28: #{tpu_custom_call.1} parent=1 // pred_region
      %2501 = dma.done [#allocation5], 192
    $region29: #{tpu_custom_call.1} parent=1 // pred_fallthru
      _
    %2502 = vsyncpa [#allocation4], 1
    %2503 = vsyncpa [#allocation5], 1

</llo_original>
